<compile_context>
chip_gen: v7x
topology: tpu7x:2x2x1
jax: 0.10.0
libtpu: 0.0.40
codegen_flags: <defaults>
</compile_context>

<pallas_src>
import functools
import math

import jax
import jax.numpy as jnp
from jax import lax
from jax.experimental import pallas as pl
from jax.experimental.pallas import tpu as pltpu

F32 = jnp.float32
BF16 = jnp.bfloat16
EPS_DENSE = 1.1e-5    # eps of the dense-block / conv0 / norm5 BatchNorms
EPS_DEFAULT = 1e-5    # PyTorch BatchNorm default eps (transitions, decode, final)


def _round_up(x, m):
    return ((x + m - 1) // m) * m


def _pad2d(x, m, n):
    M, N = x.shape
    if m == M and n == N:
        return x
    return jnp.pad(x, ((0, m - M), (0, n - N)))


def _pad_m(M):
    """Padded row count for matmul operands (bounded waste, prefers big tiles)."""
    if M <= 512:
        return _round_up(M, 8)
    for tm in (512, 256):
        Mp = _round_up(M, tm)
        if Mp - M <= M // 8:
            return Mp
    return _round_up(M, 128)


def _pad_rows(R):
    """Padded row count for the elementwise kernels."""
    return _round_up(R, 8) if R <= 256 else _round_up(R, 256)


def _mm_tiles(Mp, Kp, Np):
    if Mp <= 512:
        tm = Mp
    elif Mp % 512 == 0:
        tm = 512
    elif Mp % 256 == 0:
        tm = 256
    else:
        tm = 128
    tk = 512 if Kp % 512 == 0 else (256 if Kp % 256 == 0 else 128)
    tn = 256 if Np % 256 == 0 else 128
    return tm, tk, tn


# -----------------------------------------------------------------------------
# Pallas kernel 1: fused matmul
#   out = (relu(A * scale + shift) if prenorm else A) @ B  [+ bias]
# A/B are bf16 (MXU), accumulation is f32, output written on the last k step.
# -----------------------------------------------------------------------------
def _make_mm_kernel(prenorm, has_bias):
    def kernel(*refs):
        i = 0
        a_ref = refs[i]; i += 1
        b_ref = refs[i]; i += 1
        if prenorm:
            s_ref = refs[i]; t_ref = refs[i + 1]; i += 2
        if has_bias:
            bias_ref = refs[i]; i += 1
        o_ref = refs[i]
        acc_ref = refs[i + 1]

        @pl.when(pl.program_id(2) == 0)
        def _():
            acc_ref[...] = jnp.zeros_like(acc_ref)

        a = a_ref[...]
        if prenorm:
            a = jnp.maximum(a.astype(F32) * s_ref[...] + t_ref[...],
                            0.0).astype(BF16)
        acc_ref[...] += jnp.dot(a, b_ref[...], preferred_element_type=F32)

        @pl.when(pl.program_id(2) == pl.num_programs(2) - 1)
        def _():
            r = acc_ref[...]
            if has_bias:
                r = r + bias_ref[...]
            o_ref[...] = r.astype(o_ref.dtype)

    return kernel


@functools.partial(jax.jit, static_argnames=("prenorm", "has_bias", "out_dtype"))
def _mm_padded(ap, bp, sp, tp, biasp, *, prenorm, has_bias, out_dtype):
    Mp, Kp = ap.shape
    _, Np = bp.shape
    tm, tk, tn = _mm_tiles(Mp, Kp, Np)

    operands = [ap, bp]
    in_specs = [pl.BlockSpec((tm, tk), lambda i, j, k: (i, k)),
                pl.BlockSpec((tk, tn), lambda i, j, k: (k, j))]
    if prenorm:
        operands += [sp, tp]
        in_specs += [pl.BlockSpec((1, tk), lambda i, j, k: (0, k)),
                     pl.BlockSpec((1, tk), lambda i, j, k: (0, k))]
    if has_bias:
        operands += [biasp]
        in_specs += [pl.BlockSpec((1, tn), lambda i, j, k: (0, j))]

    return pl.pallas_call(
        _make_mm_kernel(prenorm, has_bias),
        out_shape=jax.ShapeDtypeStruct((Mp, Np), out_dtype),
        grid_spec=pltpu.PrefetchScalarGridSpec(
            num_scalar_prefetch=0,
            grid=(Mp // tm, Np // tn, Kp // tk),
            in_specs=in_specs,
            out_specs=pl.BlockSpec((tm, tn), lambda i, j, k: (i, j)),
            scratch_shapes=[pltpu.VMEM((tm, tn), F32)]),
        compiler_params=pltpu.CompilerParams(
            dimension_semantics=("parallel", "parallel", "arbitrary")),
    )(*operands)


def matmul(a, b, *, scale=None, shift=None, bias=None, out_dtype=BF16):
    """a: (M, K), b: (K, N).  If scale/shift given: relu(a*scale+shift) @ b."""
    M, K = a.shape
    _, N = b.shape
    Mp = _pad_m(M)
    Kp = _round_up(K, 128)
    Np = _round_up(N, 128)
    ap = _pad2d(a.astype(BF16), Mp, Kp)
    bp = _pad2d(b.astype(BF16), Kp, Np)
    prenorm = scale is not None
    has_bias = bias is not None
    sp = tp = biasp = None
    if prenorm:
        sp = jnp.pad(scale.astype(F32), (0, Kp - K)).reshape(1, Kp)
        tp = jnp.pad(shift.astype(F32), (0, Kp - K)).reshape(1, Kp)
    if has_bias:
        biasp = jnp.pad(bias.astype(F32), (0, Np - N)).reshape(1, Np)
    out = _mm_padded(ap, bp, sp, tp, biasp,
                     prenorm=prenorm, has_bias=has_bias, out_dtype=out_dtype)
    return out[:M, :N]


# -----------------------------------------------------------------------------
# Pallas kernel 2: standalone per-channel affine + ReLU (BN+Scale+ReLU), lane
# dense (spatial folded into lanes when possible).
# -----------------------------------------------------------------------------
def _affine_kernel(x_ref, a_ref, c_ref, o_ref):
    y = x_ref[...].astype(F32) * a_ref[...] + c_ref[...]
    o_ref[...] = jnp.maximum(y, 0.0).astype(o_ref.dtype)


@jax.jit
def _affine_padded(xp, ap, cp):
    Rp, Lp = xp.shape
    tm = Rp if Rp <= 256 else 256
    return pl.pallas_call(
        _affine_kernel,
        out_shape=jax.ShapeDtypeStruct((Rp, Lp), BF16),
        grid_spec=pltpu.PrefetchScalarGridSpec(
            num_scalar_prefetch=0,
            grid=(Rp // tm,),
            in_specs=[pl.BlockSpec((tm, Lp), lambda i: (i, 0)),
                      pl.BlockSpec((1, Lp), lambda i: (0, 0)),
                      pl.BlockSpec((1, Lp), lambda i: (0, 0))],
            out_specs=pl.BlockSpec((tm, Lp), lambda i: (i, 0))),
        compiler_params=pltpu.CompilerParams(
            dimension_semantics=("parallel",)),
    )(xp, ap, cp)


def bn_affine_relu(x, scale, shift):
    """x: (..., C) bf16 -> relu(x*scale + shift) in bf16, lane-dense layout."""
    C = x.shape[-1]
    x2 = x.reshape(-1, C)
    M = x2.shape[0]
    f = 128 // math.gcd(C, 128)
    if f > 1 and M % f == 0 and C * f <= 1024:
        lanes = C * f
        x2 = x2.reshape(M // f, lanes)
        a = jnp.tile(scale, f)
        c = jnp.tile(shift, f)
    else:
        lanes = C
        a, c = scale, shift
    R, L = x2.shape
    Lp = _round_up(L, 128)
    Rp = _pad_rows(R)
    xp = _pad2d(x2.astype(BF16), Rp, Lp)
    ap = jnp.pad(a.astype(F32), (0, Lp - L)).reshape(1, Lp)
    cp = jnp.pad(c.astype(F32), (0, Lp - L)).reshape(1, Lp)
    out = _affine_padded(xp, ap, cp)[:R, :L].reshape(M, C)
    return out.reshape(x.shape)


# -----------------------------------------------------------------------------
# Pallas kernel 3: elementwise add (feature2d + feature3d), lane-dense.
# -----------------------------------------------------------------------------
def _add_kernel(x_ref, y_ref, o_ref):
    o_ref[...] = x_ref[...] + y_ref[...]


@jax.jit
def _add_padded(xp, yp):
    Rp, Lp = xp.shape
    tm = Rp if Rp <= 256 else 256
    return pl.pallas_call(
        _add_kernel,
        out_shape=jax.ShapeDtypeStruct((Rp, Lp), BF16),
        grid_spec=pltpu.PrefetchScalarGridSpec(
            num_scalar_prefetch=0,
            grid=(Rp // tm,),
            in_specs=[pl.BlockSpec((tm, Lp), lambda i: (i, 0)),
                      pl.BlockSpec((tm, Lp), lambda i: (i, 0))],
            out_specs=pl.BlockSpec((tm, Lp), lambda i: (i, 0))),
        compiler_params=pltpu.CompilerParams(
            dimension_semantics=("parallel",)),
    )(xp, yp)


def add_nd(x, y):
    shape = x.shape
    total = int(x.size)
    if total % 128 == 0:
        x2 = x.reshape(-1, 128).astype(BF16)
        y2 = y.reshape(-1, 128).astype(BF16)
    else:
        C = shape[-1]
        x2 = x.reshape(-1, C).astype(BF16)
        y2 = y.reshape(-1, C).astype(BF16)
    R, L = x2.shape
    Lp = _round_up(L, 128)
    Rp = _pad_rows(R)
    out = _add_padded(_pad2d(x2, Rp, Lp), _pad2d(y2, Rp, Lp))
    return out[:R, :L].reshape(shape)


# -----------------------------------------------------------------------------
# BatchNorm statistics (training mode, biased variance, BN weight=1/bias=0 and
# Scale gamma=1/beta=0 as in a fresh nn.Module).  Returns (a, c) with
# y = relu(x*a + c) equivalent to BN+Scale+ReLU.  One fused f32 reduction pass.
# -----------------------------------------------------------------------------
@functools.partial(jax.jit, static_argnames=("eps",))
def _bn_stats(x2, eps):
    xf = x2.astype(F32)
    mean = jnp.mean(xf, axis=0)
    var = jnp.maximum(jnp.mean(jnp.square(xf), axis=0) - jnp.square(mean), 0.0)
    a = lax.rsqrt(var + eps)
    return a, -mean * a


def bn_params(x, eps):
    C = x.shape[-1]
    return _bn_stats(x.reshape(-1, C), eps)


# -----------------------------------------------------------------------------
# Convolutions (im2col glue in JAX -- bf16 -- matmul in Pallas).
# 1x1 convs support fused "prenorm" (BN+Scale+ReLU applied to their input inside
# the matmul kernel).  Spatially-padded convs cannot use prenorm (the zero
# border must be post-ReLU), so their BN is applied by the standalone affine.
# -----------------------------------------------------------------------------
def conv1x1(x, w, *, scale=None, shift=None, bias=None, out_dtype=BF16):
    C = x.shape[-1]
    y = matmul(x.reshape(-1, C), w, scale=scale, shift=shift,
               bias=bias, out_dtype=out_dtype)
    return y.reshape(x.shape[:-1] + (w.shape[-1],))


def conv2d(x, w, *, bias=None, stride=1, pad=0, out_dtype=BF16):
    """x: (N, H, W, Cin) bf16, w: (kh, kw, Cin, Cout)."""
    N, H, W, Cin = x.shape
    kh, kw, _, Cout = w.shape
    Ho = (H + 2 * pad - kh) // stride + 1
    Wo = (W + 2 * pad - kw) // stride + 1
    xp = jnp.pad(x, ((0, 0), (pad, pad), (pad, pad), (0, 0)))
    cols = []
    for ki in range(kh):
        for kj in range(kw):
            cols.append(xp[:, ki:ki + stride * Ho:stride,
                           kj:kj + stride * Wo:stride, :])
    # TODO(synk): the kh*kw-expanded im2col copy could be avoided entirely by
    # indexing shifted windows from the matmul grid; kept explicit (in bf16).
    a = jnp.concatenate(cols, axis=-1).reshape(N * Ho * Wo, kh * kw * Cin)
    y = matmul(a, w.reshape(kh * kw * Cin, Cout), bias=bias, out_dtype=out_dtype)
    return y.reshape(N, Ho, Wo, Cout)


def conv3d(x, w, *, bias=None, stride=1, pad=0, out_dtype=BF16):
    """x: (N, D, H, W, Cin) bf16, w: (kd, kh, kw, Cin, Cout)."""
    N, D, H, W, Cin = x.shape
    kd, kh, kw, _, Cout = w.shape
    Do = (D + 2 * pad - kd) // stride + 1
    Ho = (H + 2 * pad - kh) // stride + 1
    Wo = (W + 2 * pad - kw) // stride + 1
    xp = jnp.pad(x, ((0, 0), (pad, pad), (pad, pad), (pad, pad), (0, 0)))
    cols = []
    for kz in range(kd):
        for ki in range(kh):
            for kj in range(kw):
                cols.append(xp[:, kz:kz + stride * Do:stride,
                               ki:ki + stride * Ho:stride,
                               kj:kj + stride * Wo:stride, :])
    a = jnp.concatenate(cols, axis=-1).reshape(
        N * Do * Ho * Wo, kd * kh * kw * Cin)
    y = matmul(a, w.reshape(kd * kh * kw * Cin, Cout), bias=bias,
               out_dtype=out_dtype)
    return y.reshape(N, Do, Ho, Wo, Cout)


# -----------------------------------------------------------------------------
# Pooling / upsampling glue (plain JAX, bf16)
# -----------------------------------------------------------------------------
def avgpool2d_2(x):
    N, H, W, C = x.shape
    return x.reshape(N, H // 2, 2, W // 2, 2, C).mean(axis=(2, 4)).astype(BF16)


def maxpool2d_3s2p1(x):
    return lax.reduce_window(x, jnp.array(-jnp.inf, x.dtype), lax.max,
                             (1, 3, 3, 1), (1, 2, 2, 1),
                             ((0, 0), (1, 1), (1, 1), (0, 0)))


def avgpool3d_122(x):
    N, D, H, W, C = x.shape
    return x.reshape(N, D, H // 2, 2, W // 2, 2, C).mean(axis=(3, 5)).astype(BF16)


def maxpool3d_3s2p1(x):
    return lax.reduce_window(x, jnp.array(-jnp.inf, x.dtype), lax.max,
                             (1, 3, 3, 3, 1), (1, 2, 2, 2, 1),
                             ((0, 0), (1, 1), (1, 1), (1, 1), (0, 0)))


def upsample2d(x, s=2):
    return jnp.repeat(jnp.repeat(x, s, axis=1), s, axis=2)


def upsample3d(x, sd, sh, sw):
    y = x
    if sd > 1:
        y = jnp.repeat(y, sd, axis=1)
    return jnp.repeat(jnp.repeat(y, sh, axis=2), sw, axis=3)


# -----------------------------------------------------------------------------
# Deterministic synthetic parameters (He-style conv init, BN/Scale defaults).
# Conv weights stored in bf16, biases in f32.
# -----------------------------------------------------------------------------
class ParamGen:
    def __init__(self, seed=0):
        self._key = jax.random.PRNGKey(seed)

    def _next(self):
        self._key, k = jax.random.split(self._key)
        return k

    def conv(self, *shape):
        fan_in = 1
        for s in shape[:-1]:
            fan_in *= s
        std = (2.0 / fan_in) ** 0.5
        w = jax.random.normal(self._next(), shape, dtype=F32) * std
        return w.astype(BF16)

    def bias(self, n):
        return jax.random.normal(self._next(), (n,), dtype=F32) * 0.01


def build_dense2d_params(pg):
    growth, block_config, nf = 48, (6, 12, 36, 24), 96
    P = {"conv0": pg.conv(7, 7, 3, nf), "blocks": [], "trans": []}
    for i, nl in enumerate(block_config):
        layers = []
        for j in range(nl):
            cin = nf + j * growth
            layers.append({
                "w1": pg.conv(1, 1, cin, 4 * growth).reshape(cin, 4 * growth),
                "w2": pg.conv(3, 3, 4 * growth, growth)})
        P["blocks"].append(layers)
        nf += nl * growth
        if i != len(block_config) - 1:
            P["trans"].append(pg.conv(1, 1, nf, nf // 2).reshape(nf, nf // 2))
            nf = nf // 2
    decode_ch = [(nf, 768), (768, 384), (384, 96), (96, 96), (96, 64)]
    P["decode"] = [(pg.conv(3, 3, ci, co), pg.bias(co)) for ci, co in decode_ch]
    return P


def build_dense3d_params(pg, num_input=4):
    growth, block_config, nf = 32, (3, 4, 12, 8), 96
    P = {"conv0": pg.conv(7, 7, 7, num_input, nf), "blocks": [], "trans": []}
    for i, nl in enumerate(block_config):
        layers = []
        for j in range(nl):
            cin = nf + j * growth
            layers.append({
                "w1": pg.conv(1, 1, 1, cin, 4 * growth).reshape(cin, 4 * growth),
                "w2": pg.conv(3, 3, 3, 4 * growth, growth)})
        P["blocks"].append(layers)
        nf += nl * growth
        if i != len(block_config) - 1:
            P["trans"].append(pg.conv(1, 1, 1, nf, nf // 2).reshape(nf, nf // 2))
            nf = nf // 2
    decode_ch = [(nf, 504), (504, 224), (224, 192), (192, 96), (96, 64)]
    P["decode"] = [(pg.conv(3, 3, 3, ci, co), pg.bias(co)) for ci, co in decode_ch]
    return P


def build_hdenseunet_params(class_num, seed=0):
    pg = ParamGen(seed)
    return {
        "dense2d": build_dense2d_params(pg),
        "dense3d": build_dense3d_params(pg, num_input=4),
        "conv2d5_w": pg.conv(1, 1, 64, 3).reshape(64, 3),
        "conv2d5_b": pg.bias(3),
        "conv3d5_w": pg.conv(1, 1, 1, 64, 3).reshape(64, 3),
        "conv3d5_b": pg.bias(3),
        "final1_w": pg.conv(3, 3, 3, 64, 64),
        "final1_b": pg.bias(64),
        "final2_w": pg.conv(1, 1, 1, 64, class_num).reshape(64, class_num),
        "final2_b": pg.bias(class_num),
    }


# -----------------------------------------------------------------------------
# Forward passes
# -----------------------------------------------------------------------------
def dense2d_forward(x, P):
    h0 = conv2d(x, P["conv0"], stride=2, pad=3)          # raw conv0 output
    a, c = bn_params(h0, EPS_DENSE)                      # norm0+scale0 stats (pre-pool)
    # affine+relu commutes with max-pool (scale>0); apply to the 4x smaller tensor.
    h = bn_affine_relu(maxpool2d_3s2p1(h0), a, c)
    for i, layers in enumerate(P["blocks"]):
        for lp in layers:                                # dense_block / conv_block
            a1, c1 = bn_params(h, EPS_DENSE)
            t = conv1x1(h, lp["w1"], scale=a1, shift=c1)     # norm1/scale1/relu1 fused
            a2, c2 = bn_params(t, EPS_DENSE)
            t = bn_affine_relu(t, a2, c2)                    # norm2/scale2/relu2
            t = conv2d(t, lp["w2"], pad=1)
            h = jnp.concatenate([h, t], axis=-1)
        if i != len(P["blocks"]) - 1:                    # _Transition
            a, c = bn_params(h, EPS_DEFAULT)
            h = conv1x1(h, P["trans"][i], scale=a, shift=c)  # norm/scale/relu fused
            h = avgpool2d_2(h)
    a, c = bn_params(h, EPS_DENSE)                       # norm5 + scale5 + relu5
    h = bn_affine_relu(h, a, c)
    for w, b in P["decode"]:                             # up -> conv -> bn -> relu
        h = upsample2d(h)
        h = conv2d(h, w, bias=b, pad=1)
        a, c = bn_params(h, EPS_DEFAULT)
        h = bn_affine_relu(h, a, c)
    return h


def dense3d_forward(x, P):
    h0 = conv3d(x, P["conv0"], stride=2, pad=3)
    a, c = bn_params(h0, EPS_DENSE)
    h = bn_affine_relu(maxpool3d_3s2p1(h0), a, c)
    for i, layers in enumerate(P["blocks"]):
        for lp in layers:
            a1, c1 = bn_params(h, EPS_DENSE)
            t = conv1x1(h, lp["w1"], scale=a1, shift=c1)
            a2, c2 = bn_params(t, EPS_DENSE)
            t = bn_affine_relu(t, a2, c2)
            t = conv3d(t, lp["w2"], pad=1)
            h = jnp.concatenate([h, t], axis=-1)
        if i != len(P["blocks"]) - 1:
            a, c = bn_params(h, EPS_DEFAULT)
            h = conv1x1(h, P["trans"][i], scale=a, shift=c)
            h = avgpool3d_122(h)
    a, c = bn_params(h, EPS_DENSE)
    h = bn_affine_relu(h, a, c)
    scales = [(1, 2, 2), (1, 2, 2), (1, 2, 2), (2, 2, 2), (2, 2, 2)]
    for (sd, sh, sw), (w, b) in zip(scales, P["decode"]):
        h = upsample3d(h, sd, sh, sw)
        h = conv3d(h, w, bias=b, pad=1)
        a, c = bn_params(h, EPS_DEFAULT)
        h = bn_affine_relu(h, a, c)
    return h


def hdenseunet_forward(x_in, P):
    # x_in: (B, 1, H, W, D) -- same input layout as the PyTorch module.
    x = jnp.squeeze(x_in, axis=1)              # (B, H, W, D)
    x = jnp.transpose(x, (0, 3, 1, 2))         # (B, D, H, W); D == num_slide
    b, num_slide, H, W = x.shape
    xb = x.astype(BF16)

    # Stacked 2-D input: 3-slice windows; group g of sample n at row g*b + n.
    groups = [jnp.stack([xb[:, 0], xb[:, 0], xb[:, 1]], axis=1)]
    for i in range(num_slide - 2):
        groups.append(xb[:, i:i + 3])
    groups.append(jnp.stack([xb[:, num_slide - 2], xb[:, num_slide - 1],
                             xb[:, num_slide - 1]], axis=1))
    input2d = jnp.concatenate(groups, axis=0)          # (b*S, 3, H, W)
    input2d = jnp.transpose(input2d, (0, 2, 3, 1))     # NHWC

    feature2d = dense2d_forward(input2d, P["dense2d"])                   # (b*S, H, W, 64)
    final2d = conv1x1(feature2d, P["conv2d5_w"], bias=P["conv2d5_b"])    # (b*S, H, W, 3)

    # regroup rows g*b+n  ->  (n, g, ...)
    fea2d = feature2d.reshape(num_slide, b, H, W, 64).transpose(1, 0, 2, 3, 4)
    res2d = final2d.reshape(num_slide, b, H, W, 3).transpose(1, 0, 2, 3, 4)

    # in3d = cat(x, 250 * input3d) over channels  (channel-last: (b, D, H, W, 4))
    in3d = jnp.concatenate(
        [xb[..., None], (res2d.astype(F32) * 250.0).astype(BF16)], axis=-1)

    feature3d = dense3d_forward(in3d, P["dense3d"])                      # (b, D, H, W, 64)
    output3d = conv1x1(feature3d, P["conv3d5_w"], bias=P["conv3d5_b"])   # unused, as in reference

    final = add_nd(fea2d, feature3d)                                     # Pallas add
    h = conv3d(final, P["final1_w"], bias=P["final1_b"], pad=1)          # finalConv3d1
    # TODO(synk): F.dropout(p=0.3, training=True) is stochastic; skipped (identity).
    a, c = bn_params(h, EPS_DEFAULT)                                     # finalBn + finalAc
    h = conv1x1(h, P["final2_w"], scale=a, shift=c,
                bias=P["final2_b"], out_dtype=F32)                       # finalConv3d2 (fused prenorm)
    # PyTorch: finalout.permute(0, 1, 3, 4, 2) of NCDHW -> (b, class, H, W, D)
    out = jnp.transpose(h, (0, 4, 2, 3, 1))
    return out, output3d


if __name__ == "__main__":
    B, H, W, D = 1, 64, 64, 4          # H, W multiple of 32; D multiple of 4
    CLASS_NUM = 3
    key = jax.random.PRNGKey(0)
    x = jax.random.uniform(key, (B, 1, H, W, D), dtype=F32)

    params = build_hdenseunet_params(CLASS_NUM, seed=0)
    out, _unused_output3d = hdenseunet_forward(x, params)
    out = jax.block_until_ready(out)

    assert out.shape == (B, CLASS_NUM, H, W, D), out.shape
    assert bool(jnp.all(jnp.isfinite(out)))
    print("KERNEL_OK")
</pallas_src>

<mosaic_0001>
module attributes {stable_mosaic.version = 11 : i64} {
  func.func @kernel(%arg0: i32, %arg1: i32, %arg2: i32, %arg3: memref<512x256xbf16, #tpu.memory_space<vmem>>, %arg4: memref<256x128xbf16, #tpu.memory_space<vmem>>, %arg5: memref<512x128xbf16, #tpu.memory_space<vmem>>, %arg6: memref<512x128xf32, #tpu.memory_space<vmem>>) attributes {dimension_semantics = [#tpu.dimension_semantics<parallel>, #tpu.dimension_semantics<parallel>, #tpu.dimension_semantics<arbitrary>], iteration_bounds = array<i64: 8, 1, 1>, scalar_prefetch = 0 : i64, scratch_operands = 1 : i64, tpu.core_type = #tpu.core_type<tc>, window_params = [{transform_indices = @transform_0, window_bounds = array<i64: 512, 256>}, {transform_indices = @transform_1, window_bounds = array<i64: 256, 128>}, {transform_indices = @transform_2, window_bounds = array<i64: 512, 128>}]} {
    %c0_i32 = arith.constant 0 : i32
    %0 = arith.cmpi eq, %arg2, %c0_i32 : i32
    %1 = arith.extui %0 : i1 to i32
    %c0_i32_0 = arith.constant 0 : i32
    %2 = arith.cmpi ne, %1, %c0_i32_0 : i32
    scf.if %2 {
      %cst_10 = arith.constant 0.000000e+00 : f32
      %12 = vector.broadcast %cst_10 : f32 to vector<512x128xf32>
      %c0_11 = arith.constant 0 : index
      %c0_12 = arith.constant 0 : index
      %13 = vector.load %arg6[%c0_11, %c0_12] : memref<512x128xf32, #tpu.memory_space<vmem>>, vector<512x128xf32>
      tpu.vector_store %arg6[%c0_11, %c0_12], %12 {strides = array<i32>} : memref<512x128xf32, #tpu.memory_space<vmem>>, vector<512x128xf32>,
    } else {
    }
    %c0 = arith.constant 0 : index
    %c0_1 = arith.constant 0 : index
    %3 = vector.load %arg3[%c0, %c0_1] : memref<512x256xbf16, #tpu.memory_space<vmem>>, vector<512x256xbf16>
    %c0_2 = arith.constant 0 : index
    %c0_3 = arith.constant 0 : index
    %4 = vector.load %arg6[%c0_2, %c0_3] : memref<512x128xf32, #tpu.memory_space<vmem>>, vector<512x128xf32>
    %c0_4 = arith.constant 0 : index
    %c0_5 = arith.constant 0 : index
    %5 = vector.load %arg4[%c0_4, %c0_5] : memref<256x128xbf16, #tpu.memory_space<vmem>>, vector<256x128xbf16>
    %cst = arith.constant dense<0.000000e+00> : vector<512x128xf32>
    %6 = tpu.matmul %3, %5, %cst {dimension_numbers = #tpu.dot_dimension_numbers<[1], [0], [0], [1], [0, 0, 1, 1], [], []>} : vector<512x256xbf16>, vector<256x128xbf16>, vector<512x128xf32> -> vector<512x128xf32>
    %7 = arith.addf %4, %6 : vector<512x128xf32>
    %c0_6 = arith.constant 0 : index
    %c0_7 = arith.constant 0 : index
    %8 = vector.load %arg6[%c0_6, %c0_7] : memref<512x128xf32, #tpu.memory_space<vmem>>, vector<512x128xf32>
    tpu.vector_store %arg6[%c0_6, %c0_7], %7 {strides = array<i32>} : memref<512x128xf32, #tpu.memory_space<vmem>>, vector<512x128xf32>,
    %c0_i32_8 = arith.constant 0 : i32
    %9 = arith.cmpi eq, %arg2, %c0_i32_8 : i32
    %10 = arith.extui %9 : i1 to i32
    %c0_i32_9 = arith.constant 0 : i32
    %11 = arith.cmpi ne, %10, %c0_i32_9 : i32
    scf.if %11 {
      %c0_10 = arith.constant 0 : index
      %c0_11 = arith.constant 0 : index
      %12 = vector.load %arg6[%c0_10, %c0_11] : memref<512x128xf32, #tpu.memory_space<vmem>>, vector<512x128xf32>
      %13 = arith.truncf %12 : vector<512x128xf32> to vector<512x128xbf16>
      %c0_12 = arith.constant 0 : index
      %c0_13 = arith.constant 0 : index
      %14 = vector.load %arg5[%c0_12, %c0_13] : memref<512x128xbf16, #tpu.memory_space<vmem>>, vector<512x128xbf16>
      tpu.vector_store %arg5[%c0_12, %c0_13], %13 {strides = array<i32>} : memref<512x128xbf16, #tpu.memory_space<vmem>>, vector<512x128xbf16>,
    } else {
    }
    return
  }
  func.func @transform_0(%arg0: i32, %arg1: i32, %arg2: i32) -> (i32, i32) {
    %c0_i32 = arith.constant 0 : i32
    return %arg0, %arg2 : i32, i32
  }
  func.func @transform_1(%arg0: i32, %arg1: i32, %arg2: i32) -> (i32, i32) {
    %c0_i32 = arith.constant 0 : i32
    return %arg2, %arg1 : i32, i32
  }
  func.func @transform_2(%arg0: i32, %arg1: i32, %arg2: i32) -> (i32, i32) {
    %c0_i32 = arith.constant 0 : i32
    return %arg0, %arg1 : i32, i32
  }
}

</mosaic_0001>

<llo_original>
// kernel: _mm_padded.1
$region0: #{_mm_padded.1}
  #allocation0 [shape = 'u32[]', space=smem, size = 0x4, offset = 0x4, fixed_abs, tag = 'smem constant byte address 0x4 - core index']
  #allocation1 [shape = 'u32[144,128]{1,0:T(1,128)}', space=vmem, size = 0x12000, scoped, tag = 'internal scratch']
  #allocation2 [shape = 'f32[512,128]{1,0:T(8,128)}', space=vmem, size = 0x40000, scoped, tag = 'scratch operand']
  %s0 = inlined_call_operand.hbm [shape: bf16[4096,256], index: 0, kind: input, shape index: {}]
  %s1 = inlined_call_operand.hbm [shape: bf16[256,128], index: 1, kind: input, shape index: {}]
  %s2 = inlined_call_operand.hbm [shape: bf16[4096,128], index: 2, kind: output, shape index: {}]
  %s3 = sld [smem:[#allocation0]]
  $region57: #{_mm_padded.1} parent=0
    _
  %s5 = ssub.s32 1, %s3
  %s6 = scalar_select 0, %s5, %s3
  $region1: #{_mm_padded.1} parent=0
    #allocation3 [shape = 'u8[524288]{0}', space=vmem, size = 0x80000, scoped, tag = 'input window, operand 0']
    #allocation4 [shape = 's32[2]{0}', space=sflag, size = 0x8, scoped, tag = 'scoped memory for _mm_padded.1']
    #allocation5 [shape = 's32[2]{0}', space=sflag, size = 0x8, scoped, tag = 'scoped memory for _mm_padded.1']
    #allocation6 [shape = 'u8[65536]{0}', space=vmem, size = 0x10000, scoped, tag = 'input window, operand 1, single buffered']
    #allocation7 [shape = 's32[1]{0}', space=sflag, size = 0x4, scoped, tag = 'scoped memory for _mm_padded.1']
    #allocation8 [shape = 'u8[262144]{0}', space=vmem, size = 0x40000, scoped, tag = 'output window, operand 0']
    %7 = vsyncpa [#allocation4], 0
    %s8 = scalar_lea.sflag [#allocation4], 1
    %9 = vsyncpa %s8, 0
    %10 = vsyncpa [#allocation7], 0
    %11 = vsyncpa [#allocation5], 0
    %s12 = scalar_lea.sflag [#allocation5], 1
    %13 = vsyncpa %s12, 0
    loop: start=0, step=1, limit=10
    $region2: #{_mm_padded.1} parent=1 // loop_pre_header
      _
    $region3: #{_mm_padded.1} parent=1 // loop_header
      %s15 = sphi 0, %s19
      %p16 = scmp.ge.s32.totalorder %s15, 10
      %s22 = sphi 0, %s41
      %s23 = sphi 0, %s37
      %s24 = sphi 0, %s33
      %s25 = sphi 0, %s22
      %s26 = sphi 0, %s23
      %s27 = sphi 0, %s24
      %s28 = sphi 0, %s25
      %s29 = sphi 0, %s26
      %s30 = sphi 0, %s27
      %s46 = sphi 0, %s48
      %s49 = sphi 0, %s46
      %s50 = sphi 0, %s49
      %s66 = sphi 0, %s50
      %s74 = sphi 0, %s76
      %s77 = sphi 0, %s74
      %s78 = sphi 0, %s77
      %s94 = sphi 0, %s78
      %s102 = sphi 0, %s104
      %s105 = sphi 0, %s102
      %s106 = sphi 0, %s105
      %s122 = sphi 0, %s106
    $region4: #{_mm_padded.1} parent=1 // loop_header_branch
      %18 = sbr.rel (%p16) target = $region8
    $region5: #{_mm_padded.1} parent=1 // loop_body
      %s20 = ssub.s32 %s15, 1
      %s21 = ssub.s32 %s15, 2
      %s31 = sadd.s32 1, %s24
      %p32 = scmp.ge.s32.totalorder %s31, 1
      %s33 = scalar_select %p32, 0, %s31
      %s34 = sadd.s32 1, %s23
      %s35 = scalar_select %p32, %s34, %s23
      %p36 = scmp.ge.s32.totalorder %s35, 1
      %s37 = scalar_select %p36, 0, %s35
      %s38 = sadd.s32 1, %s22
      %s39 = scalar_select %p36, %s38, %s22
      %p40 = scmp.ge.s32.totalorder %s39, 8
      %s41 = scalar_select %p40, 0, %s39
      %s42 = ssub.s32 %s22, %s41
      %s43 = ssub.s32 %s24, %s33
      %s44 = sor.u32 %s42, %s43
      %p45 = scmp.eq.s32.totalorder %s44, 0
      %s47 = sadd.s32 %s46, 1
      %s48 = scalar_select %p45, %s46, %s47
      %p51 = pneg %p45
      %p52 = scmp.eq.s32.totalorder %s15, 7
      %p53 = por %p51, %p52
      %p54 = scmp.ne.s32.totalorder %s46, %s49
      %p55 = scmp.eq.s32.totalorder %s15, 0
      %p56 = por %p54, %p55
      %p57 = scmp.ne.s32.totalorder %s46, %s49
      %p58 = scmp.eq.s32.totalorder %s20, 7
      %p59 = por %p57, %p58
      %p60 = scmp.ne.s32.totalorder %s49, %s50
      %p61 = scmp.eq.s32.totalorder %s20, 0
      %p62 = por %p60, %p61
      %p63 = scmp.ne.s32.totalorder %s49, %s50
      %p64 = scmp.eq.s32.totalorder %s21, 7
      %p65 = por %p63, %p64
      %p67 = scmp.ne.s32.totalorder %s50, %s66
      %p68 = scmp.eq.s32.totalorder %s21, 0
      %p69 = por %p67, %p68
      %s70 = ssub.s32 %s24, %s33
      %s71 = ssub.s32 %s23, %s37
      %s72 = sor.u32 %s70, %s71
      %p73 = scmp.eq.s32.totalorder %s72, 0
      %s75 = sadd.s32 %s74, 1
      %s76 = scalar_select %p73, %s74, %s75
      %p79 = pneg %p73
      %p80 = scmp.eq.s32.totalorder %s15, 7
      %p81 = por %p79, %p80
      %p82 = scmp.ne.s32.totalorder %s74, %s77
      %p83 = scmp.eq.s32.totalorder %s15, 0
      %p84 = por %p82, %p83
      %p85 = scmp.ne.s32.totalorder %s74, %s77
      %p86 = scmp.eq.s32.totalorder %s20, 7
      %p87 = por %p85, %p86
      %p88 = scmp.ne.s32.totalorder %s77, %s78
      %p89 = scmp.eq.s32.totalorder %s20, 0
      %p90 = por %p88, %p89
      %p91 = scmp.ne.s32.totalorder %s77, %s78
      %p92 = scmp.eq.s32.totalorder %s21, 7
      %p93 = por %p91, %p92
      %p95 = scmp.ne.s32.totalorder %s78, %s94
      %p96 = scmp.eq.s32.totalorder %s21, 0
      %p97 = por %p95, %p96
      %s98 = ssub.s32 %s22, %s41
      %s99 = ssub.s32 %s23, %s37
      %s100 = sor.u32 %s98, %s99
      %p101 = scmp.eq.s32.totalorder %s100, 0
      %s103 = sadd.s32 %s102, 1
      %s104 = scalar_select %p101, %s102, %s103
      %p107 = pneg %p101
      %p108 = scmp.eq.s32.totalorder %s15, 7
      %p109 = por %p107, %p108
      %p110 = scmp.ne.s32.totalorder %s102, %s105
      %p111 = scmp.eq.s32.totalorder %s15, 0
      %p112 = por %p110, %p111
      %p113 = scmp.ne.s32.totalorder %s102, %s105
      %p114 = scmp.eq.s32.totalorder %s20, 7
      %p115 = por %p113, %p114
      %p116 = scmp.ne.s32.totalorder %s105, %s106
      %p117 = scmp.eq.s32.totalorder %s20, 0
      %p118 = por %p116, %p117
      %p119 = scmp.ne.s32.totalorder %s105, %s106
      %p120 = scmp.eq.s32.totalorder %s21, 7
      %p121 = por %p119, %p120
      %p123 = scmp.ne.s32.totalorder %s106, %s122
      %p124 = scmp.eq.s32.totalorder %s21, 0
      %p125 = por %p123, %p124
      %p126 = scmp.le.s32.totalorder 1, %s15
      %p127 = scmp.lt.s32.totalorder %s15, 9
      %p128 = pnand %p126, %p127
      %p129 = pneg %p128
      // Predicated region
      $region9: #{_mm_padded.1} parent=5 // pred_check
        _
      $region10: #{_mm_padded.1} parent=5 // pred_check_branch
        %131 = sbr.rel (%p128) target = $region12
      $region11: #{_mm_padded.1} parent=5 // pred_region
        %s132 = ssub.s32 %s15, 1
        // Predicated region
        $region13: #{_mm_padded.1} parent=11 // pred_check
          %p133 = pneg %p90
        $region14: #{_mm_padded.1} parent=11 // pred_check_branch
          %135 = sbr.rel (%p133) target = $region16
        $region15: #{_mm_padded.1} parent=11 // pred_region
          %s136 = smul.u32 32, %s27
          %s138 = ssub.s32 2048, 2048
          %139 = vsyncadd [#allocation7], %s138
          %s140 = sadd.s32 %s26, %s136
          %s141 = smul.addr %s140, 64
          %s142 = scalar_lea.hbm %s1, %s141
          %s143 = sshll.u32 [#allocation6], 4
          %s144 = int_to_ptr.vmem [resolvable:$true] %s143
          %149 = dma.hbm_to_vmem [thread:$0]  %s142, 2048, %s144, [#allocation7], 64, 64, 4
        $region16: #{_mm_padded.1} parent=11 // pred_fallthru
          _
      $region12: #{_mm_padded.1} parent=5 // pred_fallthru
        _
      %p150 = scmp.lt.s32.totalorder %s15, 8
      // Predicated region
      $region17: #{_mm_padded.1} parent=5 // pred_check
        %p151 = pneg %p150
      $region18: #{_mm_padded.1} parent=5 // pred_check_branch
        %153 = sbr.rel (%p151) target = $region20
      $region19: #{_mm_padded.1} parent=5 // pred_region
        // Predicated region
        $region21: #{_mm_padded.1} parent=19 // pred_check
          %p154 = pneg %p56
        $region22: #{_mm_padded.1} parent=19 // pred_check_branch
          %156 = sbr.rel (%p154) target = $region24
        $region23: #{_mm_padded.1} parent=19 // pred_region
          %s157 = sand.u32 %s46, 1
          %s158 = scalar_lea.sflag [#allocation4], %s157
          %s159 = sand.u32 %s46, 1
          %s160 = smul.addr %s159, 512
          %s161 = scalar_lea.vmem [#allocation3], %s160
          %s162 = smul.u32 64, %s22
          %s163 = smul.u32 2, %s24
          %s165 = ssub.s32 8192, 8192
          %166 = vsyncadd %s158, %s165
          %s167 = smul.addr %s162, 2
          %s168 = sadd.s32 %s163, %s167
          %s169 = smul.addr %s168, 64
          %s170 = scalar_lea.hbm %s0, %s169
          %s171 = sshll.u32 %s161, 4
          %s172 = int_to_ptr.vmem [resolvable:$true] %s171
          %177 = dma.hbm_to_vmem [thread:$0]  %s170, 8192, %s172, %s158, 128, 128, 8
        $region24: #{_mm_padded.1} parent=19 // pred_fallthru
          _
      $region20: #{_mm_padded.1} parent=5 // pred_fallthru
        _
      %p178 = scmp.le.s32.totalorder 1, %s15
      %p179 = scmp.lt.s32.totalorder %s15, 9
      %p180 = pnand %p178, %p179
      %p181 = pneg %p180
      // Predicated region
      $region25: #{_mm_padded.1} parent=5 // pred_check
        _
      $region26: #{_mm_padded.1} parent=5 // pred_check_branch
        %183 = sbr.rel (%p180) target = $region28
      $region27: #{_mm_padded.1} parent=5 // pred_region
        %s184 = ssub.s32 %s15, 1
        %s185 = sand.u32 %s49, 1
        %s186 = scalar_lea.sflag [#allocation4], %s185
        %s187 = sand.u32 %s49, 1
        %s188 = smul.addr %s187, 512
        %s189 = scalar_lea.vmem [#allocation3], %s188
        // Predicated region
        $region29: #{_mm_padded.1} parent=27 // pred_check
          %p190 = pneg %p62
        $region30: #{_mm_padded.1} parent=27 // pred_check_branch
          %192 = sbr.rel (%p190) target = $region32
        $region31: #{_mm_padded.1} parent=27 // pred_region
          %193 = dma.done %s186, 8192
        $region32: #{_mm_padded.1} parent=27 // pred_fallthru
          _
        // Predicated region
        $region33: #{_mm_padded.1} parent=27 // pred_check
          %p194 = pneg %p90
        $region34: #{_mm_padded.1} parent=27 // pred_check_branch
          %196 = sbr.rel (%p194) target = $region36
        $region35: #{_mm_padded.1} parent=27 // pred_region
          %197 = dma.done [#allocation7], 2048
        $region36: #{_mm_padded.1} parent=27 // pred_fallthru
          _
        %s198 = sand.u32 %s49, 1
        %s199 = scalar_lea.sflag [#allocation4], %s198
        %s200 = sand.u32 %s49, 1
        %s201 = smul.addr %s200, 512
        %s202 = scalar_lea.vmem [#allocation3], %s201
        %p203 = pneg %p62
        %p204 = pneg %p59
        %p205 = pneg %p90
        %p206 = pneg %p87
        %p207 = pneg %p118
        %p208 = pneg %p115
        %s209 = sand.u32 %s105, 1
        %s210 = scalar_lea.sflag [#allocation5], %s209
        %s211 = sand.u32 %s105, 1
        %s212 = smul.addr %s211, 256
        %s213 = scalar_lea.vmem [#allocation8], %s212
        %s214 = smul.u32 64, %s25
        %s215 = smul.u32 2, %s27
        %s216 = smul.u32 32, %s27
        %s217 = smul.u32 64, %s25
        %p219 = scmp.eq.s32.totalorder %s27, 0
        // Predicated region
        $region37: #{_mm_padded.1} parent=27 // pred_check
          %p220 = pneg %p219
        $region38: #{_mm_padded.1} parent=27 // pred_check_branch
          %222 = sbr.rel (%p220) target = $region40
        $region39: #{_mm_padded.1} parent=27 // pred_region
          %223 = vst [vmem:[#allocation2] sm:$0xff] 0.0
          %224 = vst [vmem:[#allocation2 + $0x8] sm:$0xff] 0.0
          %225 = vst [vmem:[#allocation2 + $0x10] sm:$0xff] 0.0
          %226 = vst [vmem:[#allocation2 + $0x18] sm:$0xff] 0.0
          %227 = vst [vmem:[#allocation2 + $0x20] sm:$0xff] 0.0
          %228 = vst [vmem:[#allocation2 + $0x28] sm:$0xff] 0.0
          %229 = vst [vmem:[#allocation2 + $0x30] sm:$0xff] 0.0
          %230 = vst [vmem:[#allocation2 + $0x38] sm:$0xff] 0.0
          %231 = vst [vmem:[#allocation2 + $0x40] sm:$0xff] 0.0
          %232 = vst [vmem:[#allocation2 + $0x48] sm:$0xff] 0.0
          %233 = vst [vmem:[#allocation2 + $0x50] sm:$0xff] 0.0
          %234 = vst [vmem:[#allocation2 + $0x58] sm:$0xff] 0.0
          %235 = vst [vmem:[#allocation2 + $0x60] sm:$0xff] 0.0
          %236 = vst [vmem:[#allocation2 + $0x68] sm:$0xff] 0.0
          %237 = vst [vmem:[#allocation2 + $0x70] sm:$0xff] 0.0
          %238 = vst [vmem:[#allocation2 + $0x78] sm:$0xff] 0.0
          %239 = vst [vmem:[#allocation2 + $0x80] sm:$0xff] 0.0
          %240 = vst [vmem:[#allocation2 + $0x88] sm:$0xff] 0.0
          %241 = vst [vmem:[#allocation2 + $0x90] sm:$0xff] 0.0
          %242 = vst [vmem:[#allocation2 + $0x98] sm:$0xff] 0.0
          %243 = vst [vmem:[#allocation2 + $0xa0] sm:$0xff] 0.0
          %244 = vst [vmem:[#allocation2 + $0xa8] sm:$0xff] 0.0
          %245 = vst [vmem:[#allocation2 + $0xb0] sm:$0xff] 0.0
          %246 = vst [vmem:[#allocation2 + $0xb8] sm:$0xff] 0.0
          %247 = vst [vmem:[#allocation2 + $0xc0] sm:$0xff] 0.0
          %248 = vst [vmem:[#allocation2 + $0xc8] sm:$0xff] 0.0
          %249 = vst [vmem:[#allocation2 + $0xd0] sm:$0xff] 0.0
          %250 = vst [vmem:[#allocation2 + $0xd8] sm:$0xff] 0.0
          %251 = vst [vmem:[#allocation2 + $0xe0] sm:$0xff] 0.0
          %252 = vst [vmem:[#allocation2 + $0xe8] sm:$0xff] 0.0
          %253 = vst [vmem:[#allocation2 + $0xf0] sm:$0xff] 0.0
          %254 = vst [vmem:[#allocation2 + $0xf8] sm:$0xff] 0.0
          %255 = vst [vmem:[#allocation2 + $0x100] sm:$0xff] 0.0
          %256 = vst [vmem:[#allocation2 + $0x108] sm:$0xff] 0.0
          %257 = vst [vmem:[#allocation2 + $0x110] sm:$0xff] 0.0
          %258 = vst [vmem:[#allocation2 + $0x118] sm:$0xff] 0.0
          %259 = vst [vmem:[#allocation2 + $0x120] sm:$0xff] 0.0
          %260 = vst [vmem:[#allocation2 + $0x128] sm:$0xff] 0.0
          %261 = vst [vmem:[#allocation2 + $0x130] sm:$0xff] 0.0
          %262 = vst [vmem:[#allocation2 + $0x138] sm:$0xff] 0.0
          %263 = vst [vmem:[#allocation2 + $0x140] sm:$0xff] 0.0
          %264 = vst [vmem:[#allocation2 + $0x148] sm:$0xff] 0.0
          %265 = vst [vmem:[#allocation2 + $0x150] sm:$0xff] 0.0
          %266 = vst [vmem:[#allocation2 + $0x158] sm:$0xff] 0.0
          %267 = vst [vmem:[#allocation2 + $0x160] sm:$0xff] 0.0
          %268 = vst [vmem:[#allocation2 + $0x168] sm:$0xff] 0.0
          %269 = vst [vmem:[#allocation2 + $0x170] sm:$0xff] 0.0
          %270 = vst [vmem:[#allocation2 + $0x178] sm:$0xff] 0.0
          %271 = vst [vmem:[#allocation2 + $0x180] sm:$0xff] 0.0
          %272 = vst [vmem:[#allocation2 + $0x188] sm:$0xff] 0.0
          %273 = vst [vmem:[#allocation2 + $0x190] sm:$0xff] 0.0
          %274 = vst [vmem:[#allocation2 + $0x198] sm:$0xff] 0.0
          %275 = vst [vmem:[#allocation2 + $0x1a0] sm:$0xff] 0.0
          %276 = vst [vmem:[#allocation2 + $0x1a8] sm:$0xff] 0.0
          %277 = vst [vmem:[#allocation2 + $0x1b0] sm:$0xff] 0.0
          %278 = vst [vmem:[#allocation2 + $0x1b8] sm:$0xff] 0.0
          %279 = vst [vmem:[#allocation2 + $0x1c0] sm:$0xff] 0.0
          %280 = vst [vmem:[#allocation2 + $0x1c8] sm:$0xff] 0.0
          %281 = vst [vmem:[#allocation2 + $0x1d0] sm:$0xff] 0.0
          %282 = vst [vmem:[#allocation2 + $0x1d8] sm:$0xff] 0.0
          %283 = vst [vmem:[#allocation2 + $0x1e0] sm:$0xff] 0.0
          %284 = vst [vmem:[#allocation2 + $0x1e8] sm:$0xff] 0.0
          %285 = vst [vmem:[#allocation2 + $0x1f0] sm:$0xff] 0.0
          %286 = vst [vmem:[#allocation2 + $0x1f8] sm:$0xff] 0.0
        $region40: #{_mm_padded.1} parent=27 // pred_fallthru
          _
        %v287 = vld [vmem:[%s189] sm:$0xff]
        %v288 = vld [vmem:[%s189 + $0x8] sm:$0xff]
        %v289 = vld [vmem:[%s189 + $0x10] sm:$0xff]
        %v290 = vld [vmem:[%s189 + $0x18] sm:$0xff]
        %v291 = vld [vmem:[%s189 + $0x20] sm:$0xff]
        %v292 = vld [vmem:[%s189 + $0x28] sm:$0xff]
        %v293 = vld [vmem:[%s189 + $0x30] sm:$0xff]
        %v294 = vld [vmem:[%s189 + $0x38] sm:$0xff]
        %v295 = vld [vmem:[%s189 + $0x40] sm:$0xff]
        %v296 = vld [vmem:[%s189 + $0x48] sm:$0xff]
        %v297 = vld [vmem:[%s189 + $0x50] sm:$0xff]
        %v298 = vld [vmem:[%s189 + $0x58] sm:$0xff]
        %v299 = vld [vmem:[%s189 + $0x60] sm:$0xff]
        %v300 = vld [vmem:[%s189 + $0x68] sm:$0xff]
        %v301 = vld [vmem:[%s189 + $0x70] sm:$0xff]
        %v302 = vld [vmem:[%s189 + $0x78] sm:$0xff]
        %v303 = vld [vmem:[%s189 + $0x80] sm:$0xff]
        %v304 = vld [vmem:[%s189 + $0x88] sm:$0xff]
        %v305 = vld [vmem:[%s189 + $0x90] sm:$0xff]
        %v306 = vld [vmem:[%s189 + $0x98] sm:$0xff]
        %v307 = vld [vmem:[%s189 + $0xa0] sm:$0xff]
        %v308 = vld [vmem:[%s189 + $0xa8] sm:$0xff]
        %v309 = vld [vmem:[%s189 + $0xb0] sm:$0xff]
        %v310 = vld [vmem:[%s189 + $0xb8] sm:$0xff]
        %v311 = vld [vmem:[%s189 + $0xc0] sm:$0xff]
        %v312 = vld [vmem:[%s189 + $0xc8] sm:$0xff]
        %v313 = vld [vmem:[%s189 + $0xd0] sm:$0xff]
        %v314 = vld [vmem:[%s189 + $0xd8] sm:$0xff]
        %v315 = vld [vmem:[%s189 + $0xe0] sm:$0xff]
        %v316 = vld [vmem:[%s189 + $0xe8] sm:$0xff]
        %v317 = vld [vmem:[%s189 + $0xf0] sm:$0xff]
        %v318 = vld [vmem:[%s189 + $0xf8] sm:$0xff]
        %v319 = vld [vmem:[%s189 + $0x100] sm:$0xff]
        %v320 = vld [vmem:[%s189 + $0x108] sm:$0xff]
        %v321 = vld [vmem:[%s189 + $0x110] sm:$0xff]
        %v322 = vld [vmem:[%s189 + $0x118] sm:$0xff]
        %v323 = vld [vmem:[%s189 + $0x120] sm:$0xff]
        %v324 = vld [vmem:[%s189 + $0x128] sm:$0xff]
        %v325 = vld [vmem:[%s189 + $0x130] sm:$0xff]
        %v326 = vld [vmem:[%s189 + $0x138] sm:$0xff]
        %v327 = vld [vmem:[%s189 + $0x140] sm:$0xff]
        %v328 = vld [vmem:[%s189 + $0x148] sm:$0xff]
        %v329 = vld [vmem:[%s189 + $0x150] sm:$0xff]
        %v330 = vld [vmem:[%s189 + $0x158] sm:$0xff]
        %v331 = vld [vmem:[%s189 + $0x160] sm:$0xff]
        %v332 = vld [vmem:[%s189 + $0x168] sm:$0xff]
        %v333 = vld [vmem:[%s189 + $0x170] sm:$0xff]
        %v334 = vld [vmem:[%s189 + $0x178] sm:$0xff]
        %v335 = vld [vmem:[%s189 + $0x180] sm:$0xff]
        %v336 = vld [vmem:[%s189 + $0x188] sm:$0xff]
        %v337 = vld [vmem:[%s189 + $0x190] sm:$0xff]
        %v338 = vld [vmem:[%s189 + $0x198] sm:$0xff]
        %v339 = vld [vmem:[%s189 + $0x1a0] sm:$0xff]
        %v340 = vld [vmem:[%s189 + $0x1a8] sm:$0xff]
        %v341 = vld [vmem:[%s189 + $0x1b0] sm:$0xff]
        %v342 = vld [vmem:[%s189 + $0x1b8] sm:$0xff]
        %v343 = vld [vmem:[%s189 + $0x1c0] sm:$0xff]
        %v344 = vld [vmem:[%s189 + $0x1c8] sm:$0xff]
        %v345 = vld [vmem:[%s189 + $0x1d0] sm:$0xff]
        %v346 = vld [vmem:[%s189 + $0x1d8] sm:$0xff]
        %v347 = vld [vmem:[%s189 + $0x1e0] sm:$0xff]
        %v348 = vld [vmem:[%s189 + $0x1e8] sm:$0xff]
        %v349 = vld [vmem:[%s189 + $0x1f0] sm:$0xff]
        %v350 = vld [vmem:[%s189 + $0x1f8] sm:$0xff]
        %v351 = vld [vmem:[#allocation2] sm:$0xff]
        %v352 = vld [vmem:[#allocation2 + $0x8] sm:$0xff]
        %v353 = vld [vmem:[#allocation2 + $0x10] sm:$0xff]
        %v354 = vld [vmem:[#allocation2 + $0x18] sm:$0xff]
        %v355 = vld [vmem:[#allocation2 + $0x20] sm:$0xff]
        %v356 = vld [vmem:[#allocation2 + $0x28] sm:$0xff]
        %v357 = vld [vmem:[#allocation2 + $0x30] sm:$0xff]
        %v358 = vld [vmem:[#allocation2 + $0x38] sm:$0xff]
        %v359 = vld [vmem:[#allocation2 + $0x40] sm:$0xff]
        %v360 = vld [vmem:[#allocation2 + $0x48] sm:$0xff]
        %v361 = vld [vmem:[#allocation2 + $0x50] sm:$0xff]
        %v362 = vld [vmem:[#allocation2 + $0x58] sm:$0xff]
        %v363 = vld [vmem:[#allocation2 + $0x60] sm:$0xff]
        %v364 = vld [vmem:[#allocation2 + $0x68] sm:$0xff]
        %v365 = vld [vmem:[#allocation2 + $0x70] sm:$0xff]
        %v366 = vld [vmem:[#allocation2 + $0x78] sm:$0xff]
        %v367 = vld [vmem:[#allocation2 + $0x80] sm:$0xff]
        %v368 = vld [vmem:[#allocation2 + $0x88] sm:$0xff]
        %v369 = vld [vmem:[#allocation2 + $0x90] sm:$0xff]
        %v370 = vld [vmem:[#allocation2 + $0x98] sm:$0xff]
        %v371 = vld [vmem:[#allocation2 + $0xa0] sm:$0xff]
        %v372 = vld [vmem:[#allocation2 + $0xa8] sm:$0xff]
        %v373 = vld [vmem:[#allocation2 + $0xb0] sm:$0xff]
        %v374 = vld [vmem:[#allocation2 + $0xb8] sm:$0xff]
        %v375 = vld [vmem:[#allocation2 + $0xc0] sm:$0xff]
        %v376 = vld [vmem:[#allocation2 + $0xc8] sm:$0xff]
        %v377 = vld [vmem:[#allocation2 + $0xd0] sm:$0xff]
        %v378 = vld [vmem:[#allocation2 + $0xd8] sm:$0xff]
        %v379 = vld [vmem:[#allocation2 + $0xe0] sm:$0xff]
        %v380 = vld [vmem:[#allocation2 + $0xe8] sm:$0xff]
        %v381 = vld [vmem:[#allocation2 + $0xf0] sm:$0xff]
        %v382 = vld [vmem:[#allocation2 + $0xf8] sm:$0xff]
        %v383 = vld [vmem:[#allocation2 + $0x100] sm:$0xff]
        %v384 = vld [vmem:[#allocation2 + $0x108] sm:$0xff]
        %v385 = vld [vmem:[#allocation2 + $0x110] sm:$0xff]
        %v386 = vld [vmem:[#allocation2 + $0x118] sm:$0xff]
        %v387 = vld [vmem:[#allocation2 + $0x120] sm:$0xff]
        %v388 = vld [vmem:[#allocation2 + $0x128] sm:$0xff]
        %v389 = vld [vmem:[#allocation2 + $0x130] sm:$0xff]
        %v390 = vld [vmem:[#allocation2 + $0x138] sm:$0xff]
        %v391 = vld [vmem:[#allocation2 + $0x140] sm:$0xff]
        %v392 = vld [vmem:[#allocation2 + $0x148] sm:$0xff]
        %v393 = vld [vmem:[#allocation2 + $0x150] sm:$0xff]
        %v394 = vld [vmem:[#allocation2 + $0x158] sm:$0xff]
        %v395 = vld [vmem:[#allocation2 + $0x160] sm:$0xff]
        %v396 = vld [vmem:[#allocation2 + $0x168] sm:$0xff]
        %v397 = vld [vmem:[#allocation2 + $0x170] sm:$0xff]
        %v398 = vld [vmem:[#allocation2 + $0x178] sm:$0xff]
        %v399 = vld [vmem:[#allocation2 + $0x180] sm:$0xff]
        %v400 = vld [vmem:[#allocation2 + $0x188] sm:$0xff]
        %v401 = vld [vmem:[#allocation2 + $0x190] sm:$0xff]
        %v402 = vld [vmem:[#allocation2 + $0x198] sm:$0xff]
        %v403 = vld [vmem:[#allocation2 + $0x1a0] sm:$0xff]
        %v404 = vld [vmem:[#allocation2 + $0x1a8] sm:$0xff]
        %v405 = vld [vmem:[#allocation2 + $0x1b0] sm:$0xff]
        %v406 = vld [vmem:[#allocation2 + $0x1b8] sm:$0xff]
        %v407 = vld [vmem:[#allocation2 + $0x1c0] sm:$0xff]
        %v408 = vld [vmem:[#allocation2 + $0x1c8] sm:$0xff]
        %v409 = vld [vmem:[#allocation2 + $0x1d0] sm:$0xff]
        %v410 = vld [vmem:[#allocation2 + $0x1d8] sm:$0xff]
        %v411 = vld [vmem:[#allocation2 + $0x1e0] sm:$0xff]
        %v412 = vld [vmem:[#allocation2 + $0x1e8] sm:$0xff]
        %v413 = vld [vmem:[#allocation2 + $0x1f0] sm:$0xff]
        %v414 = vld [vmem:[#allocation2 + $0x1f8] sm:$0xff]
        %v415 = vld [vmem:[#allocation6] sm:$0xf]
        %v416 = vld [vmem:[#allocation6 + $0x4] sm:$0xf]
        %v417 = vld [vmem:[#allocation6 + $0x8] sm:$0xf]
        %v418 = vld [vmem:[#allocation6 + $0xc] sm:$0xf]
        %v419 = vld [vmem:[#allocation6 + $0x10] sm:$0xf]
        %v420 = vld [vmem:[#allocation6 + $0x14] sm:$0xf]
        %v421 = vld [vmem:[#allocation6 + $0x18] sm:$0xf]
        %v422 = vld [vmem:[#allocation6 + $0x1c] sm:$0xf]
        %v423 = vld [vmem:[#allocation6 + $0x20] sm:$0xf]
        %v424 = vld [vmem:[#allocation6 + $0x24] sm:$0xf]
        %v425 = vld [vmem:[#allocation6 + $0x28] sm:$0xf]
        %v426 = vld [vmem:[#allocation6 + $0x2c] sm:$0xf]
        %v427 = vld [vmem:[#allocation6 + $0x30] sm:$0xf]
        %v428 = vld [vmem:[#allocation6 + $0x34] sm:$0xf]
        %v429 = vld [vmem:[#allocation6 + $0x38] sm:$0xf]
        %v430 = vld [vmem:[#allocation6 + $0x3c] sm:$0xf]
        %v431 = vld [vmem:[#allocation6 + $0x40] sm:$0xf]
        %v432 = vld [vmem:[#allocation6 + $0x44] sm:$0xf]
        %v433 = vld [vmem:[#allocation6 + $0x48] sm:$0xf]
        %v434 = vld [vmem:[#allocation6 + $0x4c] sm:$0xf]
        %v435 = vld [vmem:[#allocation6 + $0x50] sm:$0xf]
        %v436 = vld [vmem:[#allocation6 + $0x54] sm:$0xf]
        %v437 = vld [vmem:[#allocation6 + $0x58] sm:$0xf]
        %v438 = vld [vmem:[#allocation6 + $0x5c] sm:$0xf]
        %v439 = vld [vmem:[#allocation6 + $0x60] sm:$0xf]
        %v440 = vld [vmem:[#allocation6 + $0x64] sm:$0xf]
        %v441 = vld [vmem:[#allocation6 + $0x68] sm:$0xf]
        %v442 = vld [vmem:[#allocation6 + $0x6c] sm:$0xf]
        %v443 = vld [vmem:[#allocation6 + $0x70] sm:$0xf]
        %v444 = vld [vmem:[#allocation6 + $0x74] sm:$0xf]
        %v445 = vld [vmem:[#allocation6 + $0x78] sm:$0xf]
        %v446 = vld [vmem:[#allocation6 + $0x7c] sm:$0xf]
        %v511 = vunpack.c.l.b16 %v287
        %v512 = vunpack.c.h.b16 %v287
        %v513 = vunpack.c.l.b16 %v288
        %v514 = vunpack.c.h.b16 %v288
        %v515 = vunpack.c.l.b16 %v289
        %v516 = vunpack.c.h.b16 %v289
        %v517 = vunpack.c.l.b16 %v290
        %v518 = vunpack.c.h.b16 %v290
        %v519 = vunpack.c.l.b16 %v291
        %v520 = vunpack.c.h.b16 %v291
        %v521 = vunpack.c.l.b16 %v292
        %v522 = vunpack.c.h.b16 %v292
        %v523 = vunpack.c.l.b16 %v293
        %v524 = vunpack.c.h.b16 %v293
        %v525 = vunpack.c.l.b16 %v294
        %v526 = vunpack.c.h.b16 %v294
        %v527 = vunpack.c.l.b16 %v295
        %v528 = vunpack.c.h.b16 %v295
        %v529 = vunpack.c.l.b16 %v296
        %v530 = vunpack.c.h.b16 %v296
        %v531 = vunpack.c.l.b16 %v297
        %v532 = vunpack.c.h.b16 %v297
        %v533 = vunpack.c.l.b16 %v298
        %v534 = vunpack.c.h.b16 %v298
        %v535 = vunpack.c.l.b16 %v299
        %v536 = vunpack.c.h.b16 %v299
        %v537 = vunpack.c.l.b16 %v300
        %v538 = vunpack.c.h.b16 %v300
        %v539 = vunpack.c.l.b16 %v301
        %v540 = vunpack.c.h.b16 %v301
        %v541 = vunpack.c.l.b16 %v302
        %v542 = vunpack.c.h.b16 %v302
        %v543 = vunpack.c.l.b16 %v303
        %v544 = vunpack.c.h.b16 %v303
        %v545 = vunpack.c.l.b16 %v304
        %v546 = vunpack.c.h.b16 %v304
        %v547 = vunpack.c.l.b16 %v305
        %v548 = vunpack.c.h.b16 %v305
        %v549 = vunpack.c.l.b16 %v306
        %v550 = vunpack.c.h.b16 %v306
        %v551 = vunpack.c.l.b16 %v307
        %v552 = vunpack.c.h.b16 %v307
        %v553 = vunpack.c.l.b16 %v308
        %v554 = vunpack.c.h.b16 %v308
        %v555 = vunpack.c.l.b16 %v309
        %v556 = vunpack.c.h.b16 %v309
        %v557 = vunpack.c.l.b16 %v310
        %v558 = vunpack.c.h.b16 %v310
        %v559 = vunpack.c.l.b16 %v311
        %v560 = vunpack.c.h.b16 %v311
        %v561 = vunpack.c.l.b16 %v312
        %v562 = vunpack.c.h.b16 %v312
        %v563 = vunpack.c.l.b16 %v313
        %v564 = vunpack.c.h.b16 %v313
        %v565 = vunpack.c.l.b16 %v314
        %v566 = vunpack.c.h.b16 %v314
        %v567 = vunpack.c.l.b16 %v315
        %v568 = vunpack.c.h.b16 %v315
        %v569 = vunpack.c.l.b16 %v316
        %v570 = vunpack.c.h.b16 %v316
        %v571 = vunpack.c.l.b16 %v317
        %v572 = vunpack.c.h.b16 %v317
        %v573 = vunpack.c.l.b16 %v318
        %v574 = vunpack.c.h.b16 %v318
        %v575 = vunpack.c.l.b16 %v319
        %v576 = vunpack.c.h.b16 %v319
        %v577 = vunpack.c.l.b16 %v320
        %v578 = vunpack.c.h.b16 %v320
        %v579 = vunpack.c.l.b16 %v321
        %v580 = vunpack.c.h.b16 %v321
        %v581 = vunpack.c.l.b16 %v322
        %v582 = vunpack.c.h.b16 %v322
        %v583 = vunpack.c.l.b16 %v323
        %v584 = vunpack.c.h.b16 %v323
        %v585 = vunpack.c.l.b16 %v324
        %v586 = vunpack.c.h.b16 %v324
        %v587 = vunpack.c.l.b16 %v325
        %v588 = vunpack.c.h.b16 %v325
        %v589 = vunpack.c.l.b16 %v326
        %v590 = vunpack.c.h.b16 %v326
        %v591 = vunpack.c.l.b16 %v327
        %v592 = vunpack.c.h.b16 %v327
        %v593 = vunpack.c.l.b16 %v328
        %v594 = vunpack.c.h.b16 %v328
        %v595 = vunpack.c.l.b16 %v329
        %v596 = vunpack.c.h.b16 %v329
        %v597 = vunpack.c.l.b16 %v330
        %v598 = vunpack.c.h.b16 %v330
        %v599 = vunpack.c.l.b16 %v331
        %v600 = vunpack.c.h.b16 %v331
        %v601 = vunpack.c.l.b16 %v332
        %v602 = vunpack.c.h.b16 %v332
        %v603 = vunpack.c.l.b16 %v333
        %v604 = vunpack.c.h.b16 %v333
        %v605 = vunpack.c.l.b16 %v334
        %v606 = vunpack.c.h.b16 %v334
        %v607 = vunpack.c.l.b16 %v335
        %v608 = vunpack.c.h.b16 %v335
        %v609 = vunpack.c.l.b16 %v336
        %v610 = vunpack.c.h.b16 %v336
        %v611 = vunpack.c.l.b16 %v337
        %v612 = vunpack.c.h.b16 %v337
        %v613 = vunpack.c.l.b16 %v338
        %v614 = vunpack.c.h.b16 %v338
        %v615 = vunpack.c.l.b16 %v339
        %v616 = vunpack.c.h.b16 %v339
        %v617 = vunpack.c.l.b16 %v340
        %v618 = vunpack.c.h.b16 %v340
        %v619 = vunpack.c.l.b16 %v341
        %v620 = vunpack.c.h.b16 %v341
        %v621 = vunpack.c.l.b16 %v342
        %v622 = vunpack.c.h.b16 %v342
        %v623 = vunpack.c.l.b16 %v343
        %v624 = vunpack.c.h.b16 %v343
        %v625 = vunpack.c.l.b16 %v344
        %v626 = vunpack.c.h.b16 %v344
        %v627 = vunpack.c.l.b16 %v345
        %v628 = vunpack.c.h.b16 %v345
        %v629 = vunpack.c.l.b16 %v346
        %v630 = vunpack.c.h.b16 %v346
        %v631 = vunpack.c.l.b16 %v347
        %v632 = vunpack.c.h.b16 %v347
        %v633 = vunpack.c.l.b16 %v348
        %v634 = vunpack.c.h.b16 %v348
        %v635 = vunpack.c.l.b16 %v349
        %v636 = vunpack.c.h.b16 %v349
        %v637 = vunpack.c.l.b16 %v350
        %v638 = vunpack.c.h.b16 %v350
        %v639 = vpack.c.b16 %v513, %v511
        %v640 = vpack.c.b16 %v514, %v512
        %v641 = vpack.c.b16 %v517, %v515
        %v642 = vpack.c.b16 %v518, %v516
        %v643 = vpack.c.b16 %v521, %v519
        %v644 = vpack.c.b16 %v522, %v520
        %v645 = vpack.c.b16 %v525, %v523
        %v646 = vpack.c.b16 %v526, %v524
        %v647 = vpack.c.b16 %v529, %v527
        %v648 = vpack.c.b16 %v530, %v528
        %v649 = vpack.c.b16 %v533, %v531
        %v650 = vpack.c.b16 %v534, %v532
        %v651 = vpack.c.b16 %v537, %v535
        %v652 = vpack.c.b16 %v538, %v536
        %v653 = vpack.c.b16 %v541, %v539
        %v654 = vpack.c.b16 %v542, %v540
        %v655 = vpack.c.b16 %v545, %v543
        %v656 = vpack.c.b16 %v546, %v544
        %v657 = vpack.c.b16 %v549, %v547
        %v658 = vpack.c.b16 %v550, %v548
        %v659 = vpack.c.b16 %v553, %v551
        %v660 = vpack.c.b16 %v554, %v552
        %v661 = vpack.c.b16 %v557, %v555
        %v662 = vpack.c.b16 %v558, %v556
        %v663 = vpack.c.b16 %v561, %v559
        %v664 = vpack.c.b16 %v562, %v560
        %v665 = vpack.c.b16 %v565, %v563
        %v666 = vpack.c.b16 %v566, %v564
        %v667 = vpack.c.b16 %v569, %v567
        %v668 = vpack.c.b16 %v570, %v568
        %v669 = vpack.c.b16 %v573, %v571
        %v670 = vpack.c.b16 %v574, %v572
        %v671 = vpack.c.b16 %v577, %v575
        %v672 = vpack.c.b16 %v578, %v576
        %v673 = vpack.c.b16 %v581, %v579
        %v674 = vpack.c.b16 %v582, %v580
        %v675 = vpack.c.b16 %v585, %v583
        %v676 = vpack.c.b16 %v586, %v584
        %v677 = vpack.c.b16 %v589, %v587
        %v678 = vpack.c.b16 %v590, %v588
        %v679 = vpack.c.b16 %v593, %v591
        %v680 = vpack.c.b16 %v594, %v592
        %v681 = vpack.c.b16 %v597, %v595
        %v682 = vpack.c.b16 %v598, %v596
        %v683 = vpack.c.b16 %v601, %v599
        %v684 = vpack.c.b16 %v602, %v600
        %v685 = vpack.c.b16 %v605, %v603
        %v686 = vpack.c.b16 %v606, %v604
        %v687 = vpack.c.b16 %v609, %v607
        %v688 = vpack.c.b16 %v610, %v608
        %v689 = vpack.c.b16 %v613, %v611
        %v690 = vpack.c.b16 %v614, %v612
        %v691 = vpack.c.b16 %v617, %v615
        %v692 = vpack.c.b16 %v618, %v616
        %v693 = vpack.c.b16 %v621, %v619
        %v694 = vpack.c.b16 %v622, %v620
        %v695 = vpack.c.b16 %v625, %v623
        %v696 = vpack.c.b16 %v626, %v624
        %v697 = vpack.c.b16 %v629, %v627
        %v698 = vpack.c.b16 %v630, %v628
        %v699 = vpack.c.b16 %v633, %v631
        %v700 = vpack.c.b16 %v634, %v632
        %v701 = vpack.c.b16 %v637, %v635
        %v702 = vpack.c.b16 %v638, %v636
        %v799 = vunpack.c.l.b16 %v415
        %v800 = vunpack.c.l.b16 %v416
        %v801 = vunpack.c.l.b16 %v417
        %v802 = vunpack.c.l.b16 %v418
        %v803 = vunpack.c.l.b16 %v419
        %v804 = vunpack.c.l.b16 %v420
        %v805 = vunpack.c.l.b16 %v421
        %v806 = vunpack.c.l.b16 %v422
        %v807 = vunpack.c.l.b16 %v423
        %v808 = vunpack.c.l.b16 %v424
        %v809 = vunpack.c.l.b16 %v425
        %v810 = vunpack.c.l.b16 %v426
        %v811 = vunpack.c.l.b16 %v427
        %v812 = vunpack.c.l.b16 %v428
        %v813 = vunpack.c.l.b16 %v429
        %v814 = vunpack.c.l.b16 %v430
        %v815 = vunpack.c.l.b16 %v431
        %v816 = vunpack.c.l.b16 %v432
        %v817 = vunpack.c.l.b16 %v433
        %v818 = vunpack.c.l.b16 %v434
        %v819 = vunpack.c.l.b16 %v435
        %v820 = vunpack.c.l.b16 %v436
        %v821 = vunpack.c.l.b16 %v437
        %v822 = vunpack.c.l.b16 %v438
        %v823 = vunpack.c.l.b16 %v439
        %v824 = vunpack.c.l.b16 %v440
        %v825 = vunpack.c.l.b16 %v441
        %v826 = vunpack.c.l.b16 %v442
        %v827 = vunpack.c.l.b16 %v443
        %v828 = vunpack.c.l.b16 %v444
        %v829 = vunpack.c.l.b16 %v445
        %v830 = vunpack.c.l.b16 %v446
        %v831 = vpack.c.b16 %v800, %v799
        %v832 = vpack.c.b16 %v802, %v801
        %v833 = vpack.c.b16 %v804, %v803
        %v834 = vpack.c.b16 %v806, %v805
        %v835 = vpack.c.b16 %v808, %v807
        %v836 = vpack.c.b16 %v810, %v809
        %v837 = vpack.c.b16 %v812, %v811
        %v838 = vpack.c.b16 %v814, %v813
        %v839 = vpack.c.b16 %v816, %v815
        %v840 = vpack.c.b16 %v818, %v817
        %v841 = vpack.c.b16 %v820, %v819
        %v842 = vpack.c.b16 %v822, %v821
        %v843 = vpack.c.b16 %v824, %v823
        %v844 = vpack.c.b16 %v826, %v825
        %v845 = vpack.c.b16 %v828, %v827
        %v846 = vpack.c.b16 %v830, %v829
        %863 = vmatprep.subr.bf16.mxu0 0
        %864 = vmatpush1.bf16.msra.mxu0 %v831
        %865 = vmatprep.subr.bf16.mxu0 0
        %866 = vmatpush1.bf16.msra.mxu0 %v832
        %867 = vmatprep.subr.bf16.mxu0 0
        %868 = vmatpush1.bf16.msra.mxu0 %v833
        %869 = vmatprep.subr.bf16.mxu0 0
        %870 = vmatpush1.bf16.msra.mxu0 %v834
        %871 = vmatprep.subr.bf16.mxu0 0
        %872 = vmatpush1.bf16.msra.mxu0 %v835
        %873 = vmatprep.subr.bf16.mxu0 0
        %874 = vmatpush1.bf16.msra.mxu0 %v836
        %875 = vmatprep.subr.bf16.mxu0 0
        %876 = vmatpush1.bf16.msra.mxu0 %v837
        %877 = vmatprep.subr.bf16.mxu0 0
        %878 = vmatpush1.bf16.msra.mxu0 %v838
        %879 = vmatprep.subr.bf16.mxu0 0
        %880 = vmatpush1.bf16.msra.mxu0 %v839
        %881 = vmatprep.subr.bf16.mxu0 0
        %882 = vmatpush1.bf16.msra.mxu0 %v840
        %883 = vmatprep.subr.bf16.mxu0 0
        %884 = vmatpush1.bf16.msra.mxu0 %v841
        %885 = vmatprep.subr.bf16.mxu0 0
        %886 = vmatpush1.bf16.msra.mxu0 %v842
        %887 = vmatprep.subr.bf16.mxu0 0
        %888 = vmatpush1.bf16.msra.mxu0 %v843
        %889 = vmatprep.subr.bf16.mxu0 0
        %890 = vmatpush1.bf16.msra.mxu0 %v844
        %891 = vmatprep.subr.bf16.mxu0 0
        %892 = vmatpush1.bf16.msra.mxu0 %v845
        %893 = vmatprep.subr.bf16.mxu0 0
        %894 = vmatpush1.bf16.msra.mxu0 %v846
        %895 = vmatprep.mubr.bf16.mxu0 %v640
        %896 = vmatmul.mubr.bf16.gmra.mrb[0].mxu0 %v639
        %v897 = vpop.f32.mrb[0].mxu0
        %v898 = vadd.f32 0.0, %v897
        %v899 = vpop.f32.mrb[0].mxu0
        %v900 = vpop.f32.mrb[0].mxu0
        %v901 = vadd.f32 0.0, %v900
        %v902 = vpop.f32.mrb[0].mxu0
        %903 = vmatprep.mubr.bf16.mxu0 %v642
        %904 = vmatmul.mubr.bf16.gmra.mrb[0].mxu0 %v641
        %v905 = vpop.f32.mrb[0].mxu0
        %v906 = vadd.f32 0.0, %v905
        %v907 = vpop.f32.mrb[0].mxu0
        %v908 = vpop.f32.mrb[0].mxu0
        %v909 = vadd.f32 0.0, %v908
        %v910 = vpop.f32.mrb[0].mxu0
        %911 = vmatprep.mubr.bf16.mxu0 %v644
        %912 = vmatmul.mubr.bf16.gmra.mrb[0].mxu0 %v643
        %v913 = vpop.f32.mrb[0].mxu0
        %v914 = vadd.f32 0.0, %v913
        %v915 = vpop.f32.mrb[0].mxu0
        %v916 = vpop.f32.mrb[0].mxu0
        %v917 = vadd.f32 0.0, %v916
        %v918 = vpop.f32.mrb[0].mxu0
        %919 = vmatprep.mubr.bf16.mxu0 %v646
        %920 = vmatmul.mubr.bf16.gmra.mrb[0].mxu0 %v645
        %v921 = vpop.f32.mrb[0].mxu0
        %v922 = vadd.f32 0.0, %v921
        %v923 = vpop.f32.mrb[0].mxu0
        %v924 = vpop.f32.mrb[0].mxu0
        %v925 = vadd.f32 0.0, %v924
        %v926 = vpop.f32.mrb[0].mxu0
        %927 = vmatprep.mubr.bf16.mxu0 %v648
        %928 = vmatmul.mubr.bf16.gmra.mrb[0].mxu0 %v647
        %v929 = vpop.f32.mrb[0].mxu0
        %v930 = vadd.f32 0.0, %v929
        %v931 = vpop.f32.mrb[0].mxu0
        %v932 = vpop.f32.mrb[0].mxu0
        %v933 = vadd.f32 0.0, %v932
        %v934 = vpop.f32.mrb[0].mxu0
        %935 = vmatprep.mubr.bf16.mxu0 %v650
        %936 = vmatmul.mubr.bf16.gmra.mrb[0].mxu0 %v649
        %v937 = vpop.f32.mrb[0].mxu0
        %v938 = vadd.f32 0.0, %v937
        %v939 = vpop.f32.mrb[0].mxu0
        %v940 = vpop.f32.mrb[0].mxu0
        %v941 = vadd.f32 0.0, %v940
        %v942 = vpop.f32.mrb[0].mxu0
        %943 = vmatprep.mubr.bf16.mxu0 %v652
        %944 = vmatmul.mubr.bf16.gmra.mrb[0].mxu0 %v651
        %v945 = vpop.f32.mrb[0].mxu0
        %v946 = vadd.f32 0.0, %v945
        %v947 = vpop.f32.mrb[0].mxu0
        %v948 = vpop.f32.mrb[0].mxu0
        %v949 = vadd.f32 0.0, %v948
        %v950 = vpop.f32.mrb[0].mxu0
        %951 = vmatprep.mubr.bf16.mxu0 %v654
        %952 = vmatmul.mubr.bf16.gmra.mrb[0].mxu0 %v653
        %v953 = vpop.f32.mrb[0].mxu0
        %v954 = vadd.f32 0.0, %v953
        %v955 = vpop.f32.mrb[0].mxu0
        %v956 = vpop.f32.mrb[0].mxu0
        %v957 = vadd.f32 0.0, %v956
        %v958 = vpop.f32.mrb[0].mxu0
        %959 = vmatprep.mubr.bf16.mxu0 %v656
        %960 = vmatmul.mubr.bf16.gmra.mrb[0].mxu0 %v655
        %v961 = vpop.f32.mrb[0].mxu0
        %v962 = vadd.f32 0.0, %v961
        %v963 = vpop.f32.mrb[0].mxu0
        %v964 = vpop.f32.mrb[0].mxu0
        %v965 = vadd.f32 0.0, %v964
        %v966 = vpop.f32.mrb[0].mxu0
        %967 = vmatprep.mubr.bf16.mxu0 %v658
        %968 = vmatmul.mubr.bf16.gmra.mrb[0].mxu0 %v657
        %v969 = vpop.f32.mrb[0].mxu0
        %v970 = vadd.f32 0.0, %v969
        %v971 = vpop.f32.mrb[0].mxu0
        %v972 = vpop.f32.mrb[0].mxu0
        %v973 = vadd.f32 0.0, %v972
        %v974 = vpop.f32.mrb[0].mxu0
        %975 = vmatprep.mubr.bf16.mxu0 %v660
        %976 = vmatmul.mubr.bf16.gmra.mrb[0].mxu0 %v659
        %v977 = vpop.f32.mrb[0].mxu0
        %v978 = vadd.f32 0.0, %v977
        %v979 = vpop.f32.mrb[0].mxu0
        %v980 = vpop.f32.mrb[0].mxu0
        %v981 = vadd.f32 0.0, %v980
        %v982 = vpop.f32.mrb[0].mxu0
        %983 = vmatprep.mubr.bf16.mxu0 %v662
        %984 = vmatmul.mubr.bf16.gmra.mrb[0].mxu0 %v661
        %v985 = vpop.f32.mrb[0].mxu0
        %v986 = vadd.f32 0.0, %v985
        %v987 = vpop.f32.mrb[0].mxu0
        %v988 = vpop.f32.mrb[0].mxu0
        %v989 = vadd.f32 0.0, %v988
        %v990 = vpop.f32.mrb[0].mxu0
        %991 = vmatprep.mubr.bf16.mxu0 %v664
        %992 = vmatmul.mubr.bf16.gmra.mrb[0].mxu0 %v663
        %v993 = vpop.f32.mrb[0].mxu0
        %v994 = vadd.f32 0.0, %v993
        %v995 = vpop.f32.mrb[0].mxu0
        %v996 = vpop.f32.mrb[0].mxu0
        %v997 = vadd.f32 0.0, %v996
        %v998 = vpop.f32.mrb[0].mxu0
        %999 = vmatprep.mubr.bf16.mxu0 %v666
        %1000 = vmatmul.mubr.bf16.gmra.mrb[0].mxu0 %v665
        %v1001 = vpop.f32.mrb[0].mxu0
        %v1002 = vadd.f32 0.0, %v1001
        %v1003 = vpop.f32.mrb[0].mxu0
        %v1004 = vpop.f32.mrb[0].mxu0
        %v1005 = vadd.f32 0.0, %v1004
        %v1006 = vpop.f32.mrb[0].mxu0
        %1007 = vmatprep.mubr.bf16.mxu0 %v668
        %1008 = vmatmul.mubr.bf16.gmra.mrb[0].mxu0 %v667
        %v1009 = vpop.f32.mrb[0].mxu0
        %v1010 = vadd.f32 0.0, %v1009
        %v1011 = vpop.f32.mrb[0].mxu0
        %v1012 = vpop.f32.mrb[0].mxu0
        %v1013 = vadd.f32 0.0, %v1012
        %v1014 = vpop.f32.mrb[0].mxu0
        %1015 = vmatprep.mubr.bf16.mxu0 %v670
        %1016 = vmatmul.mubr.bf16.gmra.mrb[0].mxu0 %v669
        %v1017 = vpop.f32.mrb[0].mxu0
        %v1018 = vadd.f32 0.0, %v1017
        %v1019 = vpop.f32.mrb[0].mxu0
        %v1020 = vpop.f32.mrb[0].mxu0
        %v1021 = vadd.f32 0.0, %v1020
        %v1022 = vpop.f32.mrb[0].mxu0
        %1023 = vmatprep.mubr.bf16.mxu0 %v672
        %1024 = vmatmul.mubr.bf16.gmra.mrb[0].mxu0 %v671
        %v1025 = vpop.f32.mrb[0].mxu0
        %v1026 = vadd.f32 0.0, %v1025
        %v1027 = vpop.f32.mrb[0].mxu0
        %v1028 = vpop.f32.mrb[0].mxu0
        %v1029 = vadd.f32 0.0, %v1028
        %v1030 = vpop.f32.mrb[0].mxu0
        %1031 = vmatprep.mubr.bf16.mxu0 %v674
        %1032 = vmatmul.mubr.bf16.gmra.mrb[0].mxu0 %v673
        %v1033 = vpop.f32.mrb[0].mxu0
        %v1034 = vadd.f32 0.0, %v1033
        %v1035 = vpop.f32.mrb[0].mxu0
        %v1036 = vpop.f32.mrb[0].mxu0
        %v1037 = vadd.f32 0.0, %v1036
        %v1038 = vpop.f32.mrb[0].mxu0
        %1039 = vmatprep.mubr.bf16.mxu0 %v676
        %1040 = vmatmul.mubr.bf16.gmra.mrb[0].mxu0 %v675
        %v1041 = vpop.f32.mrb[0].mxu0
        %v1042 = vadd.f32 0.0, %v1041
        %v1043 = vpop.f32.mrb[0].mxu0
        %v1044 = vpop.f32.mrb[0].mxu0
        %v1045 = vadd.f32 0.0, %v1044
        %v1046 = vpop.f32.mrb[0].mxu0
        %1047 = vmatprep.mubr.bf16.mxu0 %v678
        %1048 = vmatmul.mubr.bf16.gmra.mrb[0].mxu0 %v677
        %v1049 = vpop.f32.mrb[0].mxu0
        %v1050 = vadd.f32 0.0, %v1049
        %v1051 = vpop.f32.mrb[0].mxu0
        %v1052 = vpop.f32.mrb[0].mxu0
        %v1053 = vadd.f32 0.0, %v1052
        %v1054 = vpop.f32.mrb[0].mxu0
        %1055 = vmatprep.mubr.bf16.mxu0 %v680
        %1056 = vmatmul.mubr.bf16.gmra.mrb[0].mxu0 %v679
        %v1057 = vpop.f32.mrb[0].mxu0
        %v1058 = vadd.f32 0.0, %v1057
        %v1059 = vpop.f32.mrb[0].mxu0
        %v1060 = vpop.f32.mrb[0].mxu0
        %v1061 = vadd.f32 0.0, %v1060
        %v1062 = vpop.f32.mrb[0].mxu0
        %1063 = vmatprep.mubr.bf16.mxu0 %v682
        %1064 = vmatmul.mubr.bf16.gmra.mrb[0].mxu0 %v681
        %v1065 = vpop.f32.mrb[0].mxu0
        %v1066 = vadd.f32 0.0, %v1065
        %v1067 = vpop.f32.mrb[0].mxu0
        %v1068 = vpop.f32.mrb[0].mxu0
        %v1069 = vadd.f32 0.0, %v1068
        %v1070 = vpop.f32.mrb[0].mxu0
        %1071 = vmatprep.mubr.bf16.mxu0 %v684
        %1072 = vmatmul.mubr.bf16.gmra.mrb[0].mxu0 %v683
        %v1073 = vpop.f32.mrb[0].mxu0
        %v1074 = vadd.f32 0.0, %v1073
        %v1075 = vpop.f32.mrb[0].mxu0
        %v1076 = vpop.f32.mrb[0].mxu0
        %v1077 = vadd.f32 0.0, %v1076
        %v1078 = vpop.f32.mrb[0].mxu0
        %1079 = vmatprep.mubr.bf16.mxu0 %v686
        %1080 = vmatmul.mubr.bf16.gmra.mrb[0].mxu0 %v685
        %v1081 = vpop.f32.mrb[0].mxu0
        %v1082 = vadd.f32 0.0, %v1081
        %v1083 = vpop.f32.mrb[0].mxu0
        %v1084 = vpop.f32.mrb[0].mxu0
        %v1085 = vadd.f32 0.0, %v1084
        %v1086 = vpop.f32.mrb[0].mxu0
        %1087 = vmatprep.mubr.bf16.mxu0 %v688
        %1088 = vmatmul.mubr.bf16.gmra.mrb[0].mxu0 %v687
        %v1089 = vpop.f32.mrb[0].mxu0
        %v1090 = vadd.f32 0.0, %v1089
        %v1091 = vpop.f32.mrb[0].mxu0
        %v1092 = vpop.f32.mrb[0].mxu0
        %v1093 = vadd.f32 0.0, %v1092
        %v1094 = vpop.f32.mrb[0].mxu0
        %1095 = vmatprep.mubr.bf16.mxu0 %v690
        %1096 = vmatmul.mubr.bf16.gmra.mrb[0].mxu0 %v689
        %v1097 = vpop.f32.mrb[0].mxu0
        %v1098 = vadd.f32 0.0, %v1097
        %v1099 = vpop.f32.mrb[0].mxu0
        %v1100 = vpop.f32.mrb[0].mxu0
        %v1101 = vadd.f32 0.0, %v1100
        %v1102 = vpop.f32.mrb[0].mxu0
        %1103 = vmatprep.mubr.bf16.mxu0 %v692
        %1104 = vmatmul.mubr.bf16.gmra.mrb[0].mxu0 %v691
        %v1105 = vpop.f32.mrb[0].mxu0
        %v1106 = vadd.f32 0.0, %v1105
        %v1107 = vpop.f32.mrb[0].mxu0
        %v1108 = vpop.f32.mrb[0].mxu0
        %v1109 = vadd.f32 0.0, %v1108
        %v1110 = vpop.f32.mrb[0].mxu0
        %1111 = vmatprep.mubr.bf16.mxu0 %v694
        %1112 = vmatmul.mubr.bf16.gmra.mrb[0].mxu0 %v693
        %v1113 = vpop.f32.mrb[0].mxu0
        %v1114 = vadd.f32 0.0, %v1113
        %v1115 = vpop.f32.mrb[0].mxu0
        %v1116 = vpop.f32.mrb[0].mxu0
        %v1117 = vadd.f32 0.0, %v1116
        %v1118 = vpop.f32.mrb[0].mxu0
        %1119 = vmatprep.mubr.bf16.mxu0 %v696
        %1120 = vmatmul.mubr.bf16.gmra.mrb[0].mxu0 %v695
        %v1121 = vpop.f32.mrb[0].mxu0
        %v1122 = vadd.f32 0.0, %v1121
        %v1123 = vpop.f32.mrb[0].mxu0
        %v1124 = vpop.f32.mrb[0].mxu0
        %v1125 = vadd.f32 0.0, %v1124
        %v1126 = vpop.f32.mrb[0].mxu0
        %1127 = vmatprep.mubr.bf16.mxu0 %v698
        %1128 = vmatmul.mubr.bf16.gmra.mrb[0].mxu0 %v697
        %v1129 = vpop.f32.mrb[0].mxu0
        %v1130 = vadd.f32 0.0, %v1129
        %v1131 = vpop.f32.mrb[0].mxu0
        %v1132 = vpop.f32.mrb[0].mxu0
        %v1133 = vadd.f32 0.0, %v1132
        %v1134 = vpop.f32.mrb[0].mxu0
        %1135 = vmatprep.mubr.bf16.mxu0 %v700
        %1136 = vmatmul.mubr.bf16.gmra.mrb[0].mxu0 %v699
        %v1137 = vpop.f32.mrb[0].mxu0
        %v1138 = vadd.f32 0.0, %v1137
        %v1139 = vpop.f32.mrb[0].mxu0
        %v1140 = vpop.f32.mrb[0].mxu0
        %v1141 = vadd.f32 0.0, %v1140
        %v1142 = vpop.f32.mrb[0].mxu0
        %1143 = vmatprep.mubr.bf16.mxu0 %v702
        %1144 = vmatmul.mubr.bf16.gmra.mrb[0].mxu0 %v701
        %v1145 = vpop.f32.mrb[0].mxu0
        %v1146 = vadd.f32 0.0, %v1145
        %v1147 = vpop.f32.mrb[0].mxu0
        %v1148 = vpop.f32.mrb[0].mxu0
        %v1149 = vadd.f32 0.0, %v1148
        %v1150 = vpop.f32.mrb[0].mxu0
        %1151 = vdwg.mxu0
        %v1152 = vadd.f32 %v351, %v898
        %v1153 = vadd.f32 %v352, %v901
        %v1154 = vadd.f32 %v353, %v906
        %v1155 = vadd.f32 %v354, %v909
        %v1156 = vadd.f32 %v355, %v914
        %v1157 = vadd.f32 %v356, %v917
        %v1158 = vadd.f32 %v357, %v922
        %v1159 = vadd.f32 %v358, %v925
        %v1160 = vadd.f32 %v359, %v930
        %v1161 = vadd.f32 %v360, %v933
        %v1162 = vadd.f32 %v361, %v938
        %v1163 = vadd.f32 %v362, %v941
        %v1164 = vadd.f32 %v363, %v946
        %v1165 = vadd.f32 %v364, %v949
        %v1166 = vadd.f32 %v365, %v954
        %v1167 = vadd.f32 %v366, %v957
        %v1168 = vadd.f32 %v367, %v962
        %v1169 = vadd.f32 %v368, %v965
        %v1170 = vadd.f32 %v369, %v970
        %v1171 = vadd.f32 %v370, %v973
        %v1172 = vadd.f32 %v371, %v978
        %v1173 = vadd.f32 %v372, %v981
        %v1174 = vadd.f32 %v373, %v986
        %v1175 = vadd.f32 %v374, %v989
        %v1176 = vadd.f32 %v375, %v994
        %v1177 = vadd.f32 %v376, %v997
        %v1178 = vadd.f32 %v377, %v1002
        %v1179 = vadd.f32 %v378, %v1005
        %v1180 = vadd.f32 %v379, %v1010
        %v1181 = vadd.f32 %v380, %v1013
        %v1182 = vadd.f32 %v381, %v1018
        %v1183 = vadd.f32 %v382, %v1021
        %v1184 = vadd.f32 %v383, %v1026
        %v1185 = vadd.f32 %v384, %v1029
        %v1186 = vadd.f32 %v385, %v1034
        %v1187 = vadd.f32 %v386, %v1037
        %v1188 = vadd.f32 %v387, %v1042
        %v1189 = vadd.f32 %v388, %v1045
        %v1190 = vadd.f32 %v389, %v1050
        %v1191 = vadd.f32 %v390, %v1053
        %v1192 = vadd.f32 %v391, %v1058
        %v1193 = vadd.f32 %v392, %v1061
        %v1194 = vadd.f32 %v393, %v1066
        %v1195 = vadd.f32 %v394, %v1069
        %v1196 = vadd.f32 %v395, %v1074
        %v1197 = vadd.f32 %v396, %v1077
        %v1198 = vadd.f32 %v397, %v1082
        %v1199 = vadd.f32 %v398, %v1085
        %v1200 = vadd.f32 %v399, %v1090
        %v1201 = vadd.f32 %v400, %v1093
        %v1202 = vadd.f32 %v401, %v1098
        %v1203 = vadd.f32 %v402, %v1101
        %v1204 = vadd.f32 %v403, %v1106
        %v1205 = vadd.f32 %v404, %v1109
        %v1206 = vadd.f32 %v405, %v1114
        %v1207 = vadd.f32 %v406, %v1117
        %v1208 = vadd.f32 %v407, %v1122
        %v1209 = vadd.f32 %v408, %v1125
        %v1210 = vadd.f32 %v409, %v1130
        %v1211 = vadd.f32 %v410, %v1133
        %v1212 = vadd.f32 %v411, %v1138
        %v1213 = vadd.f32 %v412, %v1141
        %v1214 = vadd.f32 %v413, %v1146
        %v1215 = vadd.f32 %v414, %v1149
        %1216 = vst [vmem:[#allocation2] sm:$0xff] %v1152
        %1217 = vst [vmem:[#allocation2 + $0x8] sm:$0xff] %v1153
        %1218 = vst [vmem:[#allocation2 + $0x10] sm:$0xff] %v1154
        %1219 = vst [vmem:[#allocation2 + $0x18] sm:$0xff] %v1155
        %1220 = vst [vmem:[#allocation2 + $0x20] sm:$0xff] %v1156
        %1221 = vst [vmem:[#allocation2 + $0x28] sm:$0xff] %v1157
        %1222 = vst [vmem:[#allocation2 + $0x30] sm:$0xff] %v1158
        %1223 = vst [vmem:[#allocation2 + $0x38] sm:$0xff] %v1159
        %1224 = vst [vmem:[#allocation2 + $0x40] sm:$0xff] %v1160
        %1225 = vst [vmem:[#allocation2 + $0x48] sm:$0xff] %v1161
        %1226 = vst [vmem:[#allocation2 + $0x50] sm:$0xff] %v1162
        %1227 = vst [vmem:[#allocation2 + $0x58] sm:$0xff] %v1163
        %1228 = vst [vmem:[#allocation2 + $0x60] sm:$0xff] %v1164
        %1229 = vst [vmem:[#allocation2 + $0x68] sm:$0xff] %v1165
        %1230 = vst [vmem:[#allocation2 + $0x70] sm:$0xff] %v1166
        %1231 = vst [vmem:[#allocation2 + $0x78] sm:$0xff] %v1167
        %1232 = vst [vmem:[#allocation2 + $0x80] sm:$0xff] %v1168
        %1233 = vst [vmem:[#allocation2 + $0x88] sm:$0xff] %v1169
        %1234 = vst [vmem:[#allocation2 + $0x90] sm:$0xff] %v1170
        %1235 = vst [vmem:[#allocation2 + $0x98] sm:$0xff] %v1171
        %1236 = vst [vmem:[#allocation2 + $0xa0] sm:$0xff] %v1172
        %1237 = vst [vmem:[#allocation2 + $0xa8] sm:$0xff] %v1173
        %1238 = vst [vmem:[#allocation2 + $0xb0] sm:$0xff] %v1174
        %1239 = vst [vmem:[#allocation2 + $0xb8] sm:$0xff] %v1175
        %1240 = vst [vmem:[#allocation2 + $0xc0] sm:$0xff] %v1176
        %1241 = vst [vmem:[#allocation2 + $0xc8] sm:$0xff] %v1177
        %1242 = vst [vmem:[#allocation2 + $0xd0] sm:$0xff] %v1178
        %1243 = vst [vmem:[#allocation2 + $0xd8] sm:$0xff] %v1179
        %1244 = vst [vmem:[#allocation2 + $0xe0] sm:$0xff] %v1180
        %1245 = vst [vmem:[#allocation2 + $0xe8] sm:$0xff] %v1181
        %1246 = vst [vmem:[#allocation2 + $0xf0] sm:$0xff] %v1182
        %1247 = vst [vmem:[#allocation2 + $0xf8] sm:$0xff] %v1183
        %1248 = vst [vmem:[#allocation2 + $0x100] sm:$0xff] %v1184
        %1249 = vst [vmem:[#allocation2 + $0x108] sm:$0xff] %v1185
        %1250 = vst [vmem:[#allocation2 + $0x110] sm:$0xff] %v1186
        %1251 = vst [vmem:[#allocation2 + $0x118] sm:$0xff] %v1187
        %1252 = vst [vmem:[#allocation2 + $0x120] sm:$0xff] %v1188
        %1253 = vst [vmem:[#allocation2 + $0x128] sm:$0xff] %v1189
        %1254 = vst [vmem:[#allocation2 + $0x130] sm:$0xff] %v1190
        %1255 = vst [vmem:[#allocation2 + $0x138] sm:$0xff] %v1191
        %1256 = vst [vmem:[#allocation2 + $0x140] sm:$0xff] %v1192
        %1257 = vst [vmem:[#allocation2 + $0x148] sm:$0xff] %v1193
        %1258 = vst [vmem:[#allocation2 + $0x150] sm:$0xff] %v1194
        %1259 = vst [vmem:[#allocation2 + $0x158] sm:$0xff] %v1195
        %1260 = vst [vmem:[#allocation2 + $0x160] sm:$0xff] %v1196
        %1261 = vst [vmem:[#allocation2 + $0x168] sm:$0xff] %v1197
        %1262 = vst [vmem:[#allocation2 + $0x170] sm:$0xff] %v1198
        %1263 = vst [vmem:[#allocation2 + $0x178] sm:$0xff] %v1199
        %1264 = vst [vmem:[#allocation2 + $0x180] sm:$0xff] %v1200
        %1265 = vst [vmem:[#allocation2 + $0x188] sm:$0xff] %v1201
        %1266 = vst [vmem:[#allocation2 + $0x190] sm:$0xff] %v1202
        %1267 = vst [vmem:[#allocation2 + $0x198] sm:$0xff] %v1203
        %1268 = vst [vmem:[#allocation2 + $0x1a0] sm:$0xff] %v1204
        %1269 = vst [vmem:[#allocation2 + $0x1a8] sm:$0xff] %v1205
        %1270 = vst [vmem:[#allocation2 + $0x1b0] sm:$0xff] %v1206
        %1271 = vst [vmem:[#allocation2 + $0x1b8] sm:$0xff] %v1207
        %1272 = vst [vmem:[#allocation2 + $0x1c0] sm:$0xff] %v1208
        %1273 = vst [vmem:[#allocation2 + $0x1c8] sm:$0xff] %v1209
        %1274 = vst [vmem:[#allocation2 + $0x1d0] sm:$0xff] %v1210
        %1275 = vst [vmem:[#allocation2 + $0x1d8] sm:$0xff] %v1211
        %1276 = vst [vmem:[#allocation2 + $0x1e0] sm:$0xff] %v1212
        %1277 = vst [vmem:[#allocation2 + $0x1e8] sm:$0xff] %v1213
        %1278 = vst [vmem:[#allocation2 + $0x1f0] sm:$0xff] %v1214
        %1279 = vst [vmem:[#allocation2 + $0x1f8] sm:$0xff] %v1215
        // Predicated region
        $region41: #{_mm_padded.1} parent=27 // pred_check
          %p1280 = pneg %p219
        $region42: #{_mm_padded.1} parent=27 // pred_check_branch
          %1282 = sbr.rel (%p1280) target = $region44
        $region43: #{_mm_padded.1} parent=27 // pred_region
          %v1283 = vld [vmem:[#allocation2] sm:$0xff]
          %v1284 = vld [vmem:[#allocation2 + $0x8] sm:$0xff]
          %v1285 = vld [vmem:[#allocation2 + $0x10] sm:$0xff]
          %v1286 = vld [vmem:[#allocation2 + $0x18] sm:$0xff]
          %v1287 = vld [vmem:[#allocation2 + $0x20] sm:$0xff]
          %v1288 = vld [vmem:[#allocation2 + $0x28] sm:$0xff]
          %v1289 = vld [vmem:[#allocation2 + $0x30] sm:$0xff]
          %v1290 = vld [vmem:[#allocation2 + $0x38] sm:$0xff]
          %v1291 = vld [vmem:[#allocation2 + $0x40] sm:$0xff]
          %v1292 = vld [vmem:[#allocation2 + $0x48] sm:$0xff]
          %v1293 = vld [vmem:[#allocation2 + $0x50] sm:$0xff]
          %v1294 = vld [vmem:[#allocation2 + $0x58] sm:$0xff]
          %v1295 = vld [vmem:[#allocation2 + $0x60] sm:$0xff]
          %v1296 = vld [vmem:[#allocation2 + $0x68] sm:$0xff]
          %v1297 = vld [vmem:[#allocation2 + $0x70] sm:$0xff]
          %v1298 = vld [vmem:[#allocation2 + $0x78] sm:$0xff]
          %v1299 = vld [vmem:[#allocation2 + $0x80] sm:$0xff]
          %v1300 = vld [vmem:[#allocation2 + $0x88] sm:$0xff]
          %v1301 = vld [vmem:[#allocation2 + $0x90] sm:$0xff]
          %v1302 = vld [vmem:[#allocation2 + $0x98] sm:$0xff]
          %v1303 = vld [vmem:[#allocation2 + $0xa0] sm:$0xff]
          %v1304 = vld [vmem:[#allocation2 + $0xa8] sm:$0xff]
          %v1305 = vld [vmem:[#allocation2 + $0xb0] sm:$0xff]
          %v1306 = vld [vmem:[#allocation2 + $0xb8] sm:$0xff]
          %v1307 = vld [vmem:[#allocation2 + $0xc0] sm:$0xff]
          %v1308 = vld [vmem:[#allocation2 + $0xc8] sm:$0xff]
          %v1309 = vld [vmem:[#allocation2 + $0xd0] sm:$0xff]
          %v1310 = vld [vmem:[#allocation2 + $0xd8] sm:$0xff]
          %v1311 = vld [vmem:[#allocation2 + $0xe0] sm:$0xff]
          %v1312 = vld [vmem:[#allocation2 + $0xe8] sm:$0xff]
          %v1313 = vld [vmem:[#allocation2 + $0xf0] sm:$0xff]
          %v1314 = vld [vmem:[#allocation2 + $0xf8] sm:$0xff]
          %v1315 = vld [vmem:[#allocation2 + $0x100] sm:$0xff]
          %v1316 = vld [vmem:[#allocation2 + $0x108] sm:$0xff]
          %v1317 = vld [vmem:[#allocation2 + $0x110] sm:$0xff]
          %v1318 = vld [vmem:[#allocation2 + $0x118] sm:$0xff]
          %v1319 = vld [vmem:[#allocation2 + $0x120] sm:$0xff]
          %v1320 = vld [vmem:[#allocation2 + $0x128] sm:$0xff]
          %v1321 = vld [vmem:[#allocation2 + $0x130] sm:$0xff]
          %v1322 = vld [vmem:[#allocation2 + $0x138] sm:$0xff]
          %v1323 = vld [vmem:[#allocation2 + $0x140] sm:$0xff]
          %v1324 = vld [vmem:[#allocation2 + $0x148] sm:$0xff]
          %v1325 = vld [vmem:[#allocation2 + $0x150] sm:$0xff]
          %v1326 = vld [vmem:[#allocation2 + $0x158] sm:$0xff]
          %v1327 = vld [vmem:[#allocation2 + $0x160] sm:$0xff]
          %v1328 = vld [vmem:[#allocation2 + $0x168] sm:$0xff]
          %v1329 = vld [vmem:[#allocation2 + $0x170] sm:$0xff]
          %v1330 = vld [vmem:[#allocation2 + $0x178] sm:$0xff]
          %v1331 = vld [vmem:[#allocation2 + $0x180] sm:$0xff]
          %v1332 = vld [vmem:[#allocation2 + $0x188] sm:$0xff]
          %v1333 = vld [vmem:[#allocation2 + $0x190] sm:$0xff]
          %v1334 = vld [vmem:[#allocation2 + $0x198] sm:$0xff]
          %v1335 = vld [vmem:[#allocation2 + $0x1a0] sm:$0xff]
          %v1336 = vld [vmem:[#allocation2 + $0x1a8] sm:$0xff]
          %v1337 = vld [vmem:[#allocation2 + $0x1b0] sm:$0xff]
          %v1338 = vld [vmem:[#allocation2 + $0x1b8] sm:$0xff]
          %v1339 = vld [vmem:[#allocation2 + $0x1c0] sm:$0xff]
          %v1340 = vld [vmem:[#allocation2 + $0x1c8] sm:$0xff]
          %v1341 = vld [vmem:[#allocation2 + $0x1d0] sm:$0xff]
          %v1342 = vld [vmem:[#allocation2 + $0x1d8] sm:$0xff]
          %v1343 = vld [vmem:[#allocation2 + $0x1e0] sm:$0xff]
          %v1344 = vld [vmem:[#allocation2 + $0x1e8] sm:$0xff]
          %v1345 = vld [vmem:[#allocation2 + $0x1f0] sm:$0xff]
          %v1346 = vld [vmem:[#allocation2 + $0x1f8] sm:$0xff]
          %v1347 = vpack.c.bf16 %v1284, %v1283
          %v1348 = vpack.c.bf16 %v1286, %v1285
          %v1349 = vpack.c.bf16 %v1288, %v1287
          %v1350 = vpack.c.bf16 %v1290, %v1289
          %v1351 = vpack.c.bf16 %v1292, %v1291
          %v1352 = vpack.c.bf16 %v1294, %v1293
          %v1353 = vpack.c.bf16 %v1296, %v1295
          %v1354 = vpack.c.bf16 %v1298, %v1297
          %v1355 = vpack.c.bf16 %v1300, %v1299
          %v1356 = vpack.c.bf16 %v1302, %v1301
          %v1357 = vpack.c.bf16 %v1304, %v1303
          %v1358 = vpack.c.bf16 %v1306, %v1305
          %v1359 = vpack.c.bf16 %v1308, %v1307
          %v1360 = vpack.c.bf16 %v1310, %v1309
          %v1361 = vpack.c.bf16 %v1312, %v1311
          %v1362 = vpack.c.bf16 %v1314, %v1313
          %v1363 = vpack.c.bf16 %v1316, %v1315
          %v1364 = vpack.c.bf16 %v1318, %v1317
          %v1365 = vpack.c.bf16 %v1320, %v1319
          %v1366 = vpack.c.bf16 %v1322, %v1321
          %v1367 = vpack.c.bf16 %v1324, %v1323
          %v1368 = vpack.c.bf16 %v1326, %v1325
          %v1369 = vpack.c.bf16 %v1328, %v1327
          %v1370 = vpack.c.bf16 %v1330, %v1329
          %v1371 = vpack.c.bf16 %v1332, %v1331
          %v1372 = vpack.c.bf16 %v1334, %v1333
          %v1373 = vpack.c.bf16 %v1336, %v1335
          %v1374 = vpack.c.bf16 %v1338, %v1337
          %v1375 = vpack.c.bf16 %v1340, %v1339
          %v1376 = vpack.c.bf16 %v1342, %v1341
          %v1377 = vpack.c.bf16 %v1344, %v1343
          %v1378 = vpack.c.bf16 %v1346, %v1345
          %v1411 = vunpack.c.l.b16 %v1347
          %v1412 = vunpack.c.h.b16 %v1347
          %v1413 = vunpack.c.l.b16 %v1348
          %v1414 = vunpack.c.h.b16 %v1348
          %v1415 = vunpack.c.l.b16 %v1349
          %v1416 = vunpack.c.h.b16 %v1349
          %v1417 = vunpack.c.l.b16 %v1350
          %v1418 = vunpack.c.h.b16 %v1350
          %v1419 = vunpack.c.l.b16 %v1351
          %v1420 = vunpack.c.h.b16 %v1351
          %v1421 = vunpack.c.l.b16 %v1352
          %v1422 = vunpack.c.h.b16 %v1352
          %v1423 = vunpack.c.l.b16 %v1353
          %v1424 = vunpack.c.h.b16 %v1353
          %v1425 = vunpack.c.l.b16 %v1354
          %v1426 = vunpack.c.h.b16 %v1354
          %v1427 = vunpack.c.l.b16 %v1355
          %v1428 = vunpack.c.h.b16 %v1355
          %v1429 = vunpack.c.l.b16 %v1356
          %v1430 = vunpack.c.h.b16 %v1356
          %v1431 = vunpack.c.l.b16 %v1357
          %v1432 = vunpack.c.h.b16 %v1357
          %v1433 = vunpack.c.l.b16 %v1358
          %v1434 = vunpack.c.h.b16 %v1358
          %v1435 = vunpack.c.l.b16 %v1359
          %v1436 = vunpack.c.h.b16 %v1359
          %v1437 = vunpack.c.l.b16 %v1360
          %v1438 = vunpack.c.h.b16 %v1360
          %v1439 = vunpack.c.l.b16 %v1361
          %v1440 = vunpack.c.h.b16 %v1361
          %v1441 = vunpack.c.l.b16 %v1362
          %v1442 = vunpack.c.h.b16 %v1362
          %v1443 = vunpack.c.l.b16 %v1363
          %v1444 = vunpack.c.h.b16 %v1363
          %v1445 = vunpack.c.l.b16 %v1364
          %v1446 = vunpack.c.h.b16 %v1364
          %v1447 = vunpack.c.l.b16 %v1365
          %v1448 = vunpack.c.h.b16 %v1365
          %v1449 = vunpack.c.l.b16 %v1366
          %v1450 = vunpack.c.h.b16 %v1366
          %v1451 = vunpack.c.l.b16 %v1367
          %v1452 = vunpack.c.h.b16 %v1367
          %v1453 = vunpack.c.l.b16 %v1368
          %v1454 = vunpack.c.h.b16 %v1368
          %v1455 = vunpack.c.l.b16 %v1369
          %v1456 = vunpack.c.h.b16 %v1369
          %v1457 = vunpack.c.l.b16 %v1370
          %v1458 = vunpack.c.h.b16 %v1370
          %v1459 = vunpack.c.l.b16 %v1371
          %v1460 = vunpack.c.h.b16 %v1371
          %v1461 = vunpack.c.l.b16 %v1372
          %v1462 = vunpack.c.h.b16 %v1372
          %v1463 = vunpack.c.l.b16 %v1373
          %v1464 = vunpack.c.h.b16 %v1373
          %v1465 = vunpack.c.l.b16 %v1374
          %v1466 = vunpack.c.h.b16 %v1374
          %v1467 = vunpack.c.l.b16 %v1375
          %v1468 = vunpack.c.h.b16 %v1375
          %v1469 = vunpack.c.l.b16 %v1376
          %v1470 = vunpack.c.h.b16 %v1376
          %v1471 = vunpack.c.l.b16 %v1377
          %v1472 = vunpack.c.h.b16 %v1377
          %v1473 = vunpack.c.l.b16 %v1378
          %v1474 = vunpack.c.h.b16 %v1378
          %v1475 = vpack.c.b16 %v1411, %v1411
          %v1476 = vpack.c.b16 %v1412, %v1412
          %v1477 = vpack.c.b16 %v1413, %v1413
          %v1478 = vpack.c.b16 %v1414, %v1414
          %v1479 = vpack.c.b16 %v1415, %v1415
          %v1480 = vpack.c.b16 %v1416, %v1416
          %v1481 = vpack.c.b16 %v1417, %v1417
          %v1482 = vpack.c.b16 %v1418, %v1418
          %v1483 = vpack.c.b16 %v1419, %v1419
          %v1484 = vpack.c.b16 %v1420, %v1420
          %v1485 = vpack.c.b16 %v1421, %v1421
          %v1486 = vpack.c.b16 %v1422, %v1422
          %v1487 = vpack.c.b16 %v1423, %v1423
          %v1488 = vpack.c.b16 %v1424, %v1424
          %v1489 = vpack.c.b16 %v1425, %v1425
          %v1490 = vpack.c.b16 %v1426, %v1426
          %v1491 = vpack.c.b16 %v1427, %v1427
          %v1492 = vpack.c.b16 %v1428, %v1428
          %v1493 = vpack.c.b16 %v1429, %v1429
          %v1494 = vpack.c.b16 %v1430, %v1430
          %v1495 = vpack.c.b16 %v1431, %v1431
          %v1496 = vpack.c.b16 %v1432, %v1432
          %v1497 = vpack.c.b16 %v1433, %v1433
          %v1498 = vpack.c.b16 %v1434, %v1434
          %v1499 = vpack.c.b16 %v1435, %v1435
          %v1500 = vpack.c.b16 %v1436, %v1436
          %v1501 = vpack.c.b16 %v1437, %v1437
          %v1502 = vpack.c.b16 %v1438, %v1438
          %v1503 = vpack.c.b16 %v1439, %v1439
          %v1504 = vpack.c.b16 %v1440, %v1440
          %v1505 = vpack.c.b16 %v1441, %v1441
          %v1506 = vpack.c.b16 %v1442, %v1442
          %v1507 = vpack.c.b16 %v1443, %v1443
          %v1508 = vpack.c.b16 %v1444, %v1444
          %v1509 = vpack.c.b16 %v1445, %v1445
          %v1510 = vpack.c.b16 %v1446, %v1446
          %v1511 = vpack.c.b16 %v1447, %v1447
          %v1512 = vpack.c.b16 %v1448, %v1448
          %v1513 = vpack.c.b16 %v1449, %v1449
          %v1514 = vpack.c.b16 %v1450, %v1450
          %v1515 = vpack.c.b16 %v1451, %v1451
          %v1516 = vpack.c.b16 %v1452, %v1452
          %v1517 = vpack.c.b16 %v1453, %v1453
          %v1518 = vpack.c.b16 %v1454, %v1454
          %v1519 = vpack.c.b16 %v1455, %v1455
          %v1520 = vpack.c.b16 %v1456, %v1456
          %v1521 = vpack.c.b16 %v1457, %v1457
          %v1522 = vpack.c.b16 %v1458, %v1458
          %v1523 = vpack.c.b16 %v1459, %v1459
          %v1524 = vpack.c.b16 %v1460, %v1460
          %v1525 = vpack.c.b16 %v1461, %v1461
          %v1526 = vpack.c.b16 %v1462, %v1462
          %v1527 = vpack.c.b16 %v1463, %v1463
          %v1528 = vpack.c.b16 %v1464, %v1464
          %v1529 = vpack.c.b16 %v1465, %v1465
          %v1530 = vpack.c.b16 %v1466, %v1466
          %v1531 = vpack.c.b16 %v1467, %v1467
          %v1532 = vpack.c.b16 %v1468, %v1468
          %v1533 = vpack.c.b16 %v1469, %v1469
          %v1534 = vpack.c.b16 %v1470, %v1470
          %v1535 = vpack.c.b16 %v1471, %v1471
          %v1536 = vpack.c.b16 %v1472, %v1472
          %v1537 = vpack.c.b16 %v1473, %v1473
          %v1538 = vpack.c.b16 %v1474, %v1474
          %1603 = vst [vmem:[%s213] sm:$0xf] %v1475
          %1604 = vst [vmem:[%s213 + $0x4] sm:$0xf] %v1476
          %1605 = vst [vmem:[%s213 + $0x8] sm:$0xf] %v1477
          %1606 = vst [vmem:[%s213 + $0xc] sm:$0xf] %v1478
          %1607 = vst [vmem:[%s213 + $0x10] sm:$0xf] %v1479
          %1608 = vst [vmem:[%s213 + $0x14] sm:$0xf] %v1480
          %1609 = vst [vmem:[%s213 + $0x18] sm:$0xf] %v1481
          %1610 = vst [vmem:[%s213 + $0x1c] sm:$0xf] %v1482
          %1611 = vst [vmem:[%s213 + $0x20] sm:$0xf] %v1483
          %1612 = vst [vmem:[%s213 + $0x24] sm:$0xf] %v1484
          %1613 = vst [vmem:[%s213 + $0x28] sm:$0xf] %v1485
          %1614 = vst [vmem:[%s213 + $0x2c] sm:$0xf] %v1486
          %1615 = vst [vmem:[%s213 + $0x30] sm:$0xf] %v1487
          %1616 = vst [vmem:[%s213 + $0x34] sm:$0xf] %v1488
          %1617 = vst [vmem:[%s213 + $0x38] sm:$0xf] %v1489
          %1618 = vst [vmem:[%s213 + $0x3c] sm:$0xf] %v1490
          %1619 = vst [vmem:[%s213 + $0x40] sm:$0xf] %v1491
          %1620 = vst [vmem:[%s213 + $0x44] sm:$0xf] %v1492
          %1621 = vst [vmem:[%s213 + $0x48] sm:$0xf] %v1493
          %1622 = vst [vmem:[%s213 + $0x4c] sm:$0xf] %v1494
          %1623 = vst [vmem:[%s213 + $0x50] sm:$0xf] %v1495
          %1624 = vst [vmem:[%s213 + $0x54] sm:$0xf] %v1496
          %1625 = vst [vmem:[%s213 + $0x58] sm:$0xf] %v1497
          %1626 = vst [vmem:[%s213 + $0x5c] sm:$0xf] %v1498
          %1627 = vst [vmem:[%s213 + $0x60] sm:$0xf] %v1499
          %1628 = vst [vmem:[%s213 + $0x64] sm:$0xf] %v1500
          %1629 = vst [vmem:[%s213 + $0x68] sm:$0xf] %v1501
          %1630 = vst [vmem:[%s213 + $0x6c] sm:$0xf] %v1502
          %1631 = vst [vmem:[%s213 + $0x70] sm:$0xf] %v1503
          %1632 = vst [vmem:[%s213 + $0x74] sm:$0xf] %v1504
          %1633 = vst [vmem:[%s213 + $0x78] sm:$0xf] %v1505
          %1634 = vst [vmem:[%s213 + $0x7c] sm:$0xf] %v1506
          %1635 = vst [vmem:[%s213 + $0x80] sm:$0xf] %v1507
          %1636 = vst [vmem:[%s213 + $0x84] sm:$0xf] %v1508
          %1637 = vst [vmem:[%s213 + $0x88] sm:$0xf] %v1509
          %1638 = vst [vmem:[%s213 + $0x8c] sm:$0xf] %v1510
          %1639 = vst [vmem:[%s213 + $0x90] sm:$0xf] %v1511
          %1640 = vst [vmem:[%s213 + $0x94] sm:$0xf] %v1512
          %1641 = vst [vmem:[%s213 + $0x98] sm:$0xf] %v1513
          %1642 = vst [vmem:[%s213 + $0x9c] sm:$0xf] %v1514
          %1643 = vst [vmem:[%s213 + $0xa0] sm:$0xf] %v1515
          %1644 = vst [vmem:[%s213 + $0xa4] sm:$0xf] %v1516
          %1645 = vst [vmem:[%s213 + $0xa8] sm:$0xf] %v1517
          %1646 = vst [vmem:[%s213 + $0xac] sm:$0xf] %v1518
          %1647 = vst [vmem:[%s213 + $0xb0] sm:$0xf] %v1519
          %1648 = vst [vmem:[%s213 + $0xb4] sm:$0xf] %v1520
          %1649 = vst [vmem:[%s213 + $0xb8] sm:$0xf] %v1521
          %1650 = vst [vmem:[%s213 + $0xbc] sm:$0xf] %v1522
          %1651 = vst [vmem:[%s213 + $0xc0] sm:$0xf] %v1523
          %1652 = vst [vmem:[%s213 + $0xc4] sm:$0xf] %v1524
          %1653 = vst [vmem:[%s213 + $0xc8] sm:$0xf] %v1525
          %1654 = vst [vmem:[%s213 + $0xcc] sm:$0xf] %v1526
          %1655 = vst [vmem:[%s213 + $0xd0] sm:$0xf] %v1527
          %1656 = vst [vmem:[%s213 + $0xd4] sm:$0xf] %v1528
          %1657 = vst [vmem:[%s213 + $0xd8] sm:$0xf] %v1529
          %1658 = vst [vmem:[%s213 + $0xdc] sm:$0xf] %v1530
          %1659 = vst [vmem:[%s213 + $0xe0] sm:$0xf] %v1531
          %1660 = vst [vmem:[%s213 + $0xe4] sm:$0xf] %v1532
          %1661 = vst [vmem:[%s213 + $0xe8] sm:$0xf] %v1533
          %1662 = vst [vmem:[%s213 + $0xec] sm:$0xf] %v1534
          %1663 = vst [vmem:[%s213 + $0xf0] sm:$0xf] %v1535
          %1664 = vst [vmem:[%s213 + $0xf4] sm:$0xf] %v1536
          %1665 = vst [vmem:[%s213 + $0xf8] sm:$0xf] %v1537
          %1666 = vst [vmem:[%s213 + $0xfc] sm:$0xf] %v1538
        $region44: #{_mm_padded.1} parent=27 // pred_fallthru
          _
        %s1667 = sand.u32 %s105, 1
        %s1668 = scalar_lea.sflag [#allocation5], %s1667
        %s1669 = sand.u32 %s105, 1
        %s1670 = smul.addr %s1669, 256
        %s1671 = scalar_lea.vmem [#allocation8], %s1670
        // Predicated region
        $region45: #{_mm_padded.1} parent=27 // pred_check
          %p1672 = pneg %p115
        $region46: #{_mm_padded.1} parent=27 // pred_check_branch
          %1674 = sbr.rel (%p1672) target = $region48
        $region47: #{_mm_padded.1} parent=27 // pred_region
          %s1675 = smul.u32 64, %s25
          %s1677 = ssub.s32 4096, 4096
          %1678 = vsyncadd %s1668, %s1677
          %s1679 = sadd.s32 %s26, %s1675
          %s1680 = smul.addr %s1679, 64
          %s1681 = scalar_lea.hbm %s2, %s1680
          %s1682 = sshll.u32 %s1671, 4
          %s1683 = int_to_ptr.vmem [resolvable:$true] %s1682
          %1688 = dma.vmem_to_hbm [thread:$0]  %s1683, 4096, %s1681, %s1668, 64, 64, 4
        $region48: #{_mm_padded.1} parent=27 // pred_fallthru
          _
      $region28: #{_mm_padded.1} parent=5 // pred_fallthru
        _
      %p1689 = scmp.le.s32.totalorder 2, %s15
      // Predicated region
      $region49: #{_mm_padded.1} parent=5 // pred_check
        %p1690 = pneg %p1689
      $region50: #{_mm_padded.1} parent=5 // pred_check_branch
        %1692 = sbr.rel (%p1690) target = $region52
      $region51: #{_mm_padded.1} parent=5 // pred_region
        %s1693 = ssub.s32 %s15, 2
        // Predicated region
        $region53: #{_mm_padded.1} parent=51 // pred_check
          %p1694 = pneg %p121
        $region54: #{_mm_padded.1} parent=51 // pred_check_branch
          %1696 = sbr.rel (%p1694) target = $region56
        $region55: #{_mm_padded.1} parent=51 // pred_region
          %s1697 = sand.u32 %s106, 1
          %s1698 = scalar_lea.sflag [#allocation5], %s1697
          %s1699 = sand.u32 %s106, 1
          %s1700 = smul.addr %s1699, 256
          %s1701 = scalar_lea.vmem [#allocation8], %s1700
          %1702 = dma.done %s1698, 4096
        $region56: #{_mm_padded.1} parent=51 // pred_fallthru
          _
      $region52: #{_mm_padded.1} parent=5 // pred_fallthru
        _
    $region6: #{_mm_padded.1} parent=1 // loop_footer
      %s19 = sadd.s32 1, %s15
    $region7: #{_mm_padded.1} parent=1 // loop_footer_branch
      %14 = sbr.rel target = $region3
    $region8: #{_mm_padded.1} parent=1 // loop_exit
      _
    %1703 = vsyncpa [#allocation4], 1
    %s1704 = scalar_lea.sflag [#allocation4], 1
    %1705 = vsyncpa %s1704, 1
    %1706 = vsyncpa [#allocation7], 1
    %1707 = vsyncpa [#allocation5], 1
    %s1708 = scalar_lea.sflag [#allocation5], 1
    %1709 = vsyncpa %s1708, 1

</llo_original>
